<compile_context>
chip_gen: v7x
topology: tpu7x:2x2x1
jax: 0.10.0
libtpu: 0.0.40
codegen_flags: <defaults>
</compile_context>

<pallas_src>
import functools

import numpy as np
import jax
import jax.numpy as jnp
from jax.experimental import pallas as pl
from jax.experimental.pallas import tpu as pltpu


# ------------------------------------------------------------------ utilities
def _bilinear_matrix(n_in: int, n_out: int) -> np.ndarray:
    """(n_out, n_in) matrix reproducing nn.Upsample(scale=2, mode='bilinear',
    align_corners=True) along one axis (separable)."""
    A = np.zeros((n_out, n_in), dtype=np.float32)
    if n_in == 1:
        A[:, 0] = 1.0
        return A
    scale = (n_in - 1) / (n_out - 1)
    for i in range(n_out):
        src = i * scale
        i0 = min(int(np.floor(src)), n_in - 1)
        i1 = min(i0 + 1, n_in - 1)
        f = src - i0
        A[i, i0] += 1.0 - f
        A[i, i1] += f
    return A


def fold_bn(gamma, beta, running_mean, running_var, eps=1e-5):
    """Fold eval-mode BatchNorm2d into per-channel scale/bias (1-D)."""
    scale = gamma / jnp.sqrt(running_var + eps)
    bias = beta - running_mean * scale
    return scale, bias


# ------------------------------------------------------------------ kernel
def _up_doubleconv_kernel(x_ref, u_ref, mask_ref,
                          w1_ref, s1_ref, b1_ref,
                          w2_ref, s2_ref, b2_ref,
                          out_ref, *, H2, W2):
    # x_ref:    (Cin, H*W)          channel-major, spatial on lanes
    # u_ref:    (H*W, S)            S = H2*W2, kron upsample operator
    # mask_ref: (9, S)              tap validity masks, tap = (dy+1)*3+(dx+1)
    # w*_ref:   (Cout, 9*Cin)       column = tap*Cin + ci
    # s*/b*:    (Cout, 1)           folded BatchNorm scale / bias
    # out_ref:  (Cout, S)
    offsets = tuple(dy * W2 + dx for dy in (-1, 0, 1) for dx in (-1, 0, 1))

    x = x_ref[...]                                   # (Cin, HW)
    masks = mask_ref[...]                            # (9, S)

    # Bilinear x2 upsample (align_corners=True): one lane-dense MXU matmul.
    up = jnp.dot(x, u_ref[...], preferred_element_type=jnp.float32)  # (Cin, S)

    def conv3x3_bn_relu(inp, w_ref, s_ref, b_ref):
        # im2col on the flat (C, S) layout: tap (dy, dx) == lane-roll by
        # -(dy*W2+dx); wrapped / out-of-image border positions zeroed by mask.
        pieces = []
        for t, d in enumerate(offsets):
            if d == 0:
                pieces.append(inp)                   # center tap: mask == 1
            else:
                pieces.append(jnp.roll(inp, -d, axis=1) * masks[t:t + 1, :])
        patches = jnp.concatenate(pieces, axis=0)    # (9*C, S)
        y = jnp.dot(w_ref[...], patches,
                    preferred_element_type=jnp.float32)   # (Cout, S)
        y = y * s_ref[...] + b_ref[...]              # folded BatchNorm (eval)
        return jnp.maximum(y, 0.0)                   # ReLU (+ Dropout = id)

    h = conv3x3_bn_relu(up, w1_ref, s1_ref, b1_ref)  # conv1 + BN + ReLU
    h = conv3x3_bn_relu(h, w2_ref, s2_ref, b2_ref)   # conv2 + BN + ReLU
    out_ref[...] = h.astype(out_ref.dtype)


# ------------------------------------------------------------------ wrapper
def up_forward(x_nchw, params):
    """Pallas implementation of Up.forward (bilinear=True). Input/output NCHW."""
    B, Cin, H, W = x_nchw.shape
    H2, W2 = 2 * H, 2 * W
    HW, S = H * W, H2 * W2
    w1, s1, b1, w2, s2, b2 = params
    Cmid, Cout = w1.shape[-1], w2.shape[-1]

    # Kronecker upsample operator: up_flat = x_flat @ U, U of shape (HW, S).
    A = _bilinear_matrix(H, H2)                       # (H2, H)
    Bw = _bilinear_matrix(W, W2)                      # (W2, W)
    U = jnp.asarray(np.kron(A, Bw).T.astype(np.float32).copy())   # (HW, S)

    # 3x3 tap validity masks on the upsampled grid: (9, S), row-major taps.
    ii, jj = np.meshgrid(np.arange(H2), np.arange(W2), indexing="ij")
    masks = np.stack([
        (((ii + dy) >= 0) & ((ii + dy) < H2) &
         ((jj + dx) >= 0) & ((jj + dx) < W2)).reshape(-1)
        for dy in (-1, 0, 1) for dx in (-1, 0, 1)
    ]).astype(np.float32)
    masks = jnp.asarray(masks)

    # Conv weights (3,3,Cin,Cout) -> (Cout, 9*Cin), column index = tap*Cin + ci.
    w1m = jnp.transpose(w1, (3, 0, 1, 2)).reshape(Cmid, 9 * Cin)
    w2m = jnp.transpose(w2, (3, 0, 1, 2)).reshape(Cout, 9 * Cmid)
    s1c, b1c = s1.reshape(Cmid, 1), b1.reshape(Cmid, 1)
    s2c, b2c = s2.reshape(Cout, 1), b2.reshape(Cout, 1)

    # Channel-major flat input: no transpose, just a reshape of NCHW.
    x_flat = x_nchw.reshape(B, Cin, HW).astype(jnp.float32)

    const = lambda a: pl.BlockSpec(a.shape, lambda b: (0,) * a.ndim)
    kernel = functools.partial(_up_doubleconv_kernel, H2=H2, W2=W2)

    out = pl.pallas_call(
        kernel,
        out_shape=jax.ShapeDtypeStruct((B, Cout, S), jnp.float32),
        grid=(B,),
        in_specs=[
            pl.BlockSpec((None, Cin, HW), lambda b: (b, 0, 0)),
            const(U), const(masks),
            const(w1m), const(s1c), const(b1c),
            const(w2m), const(s2c), const(b2c),
        ],
        out_specs=pl.BlockSpec((None, Cout, S), lambda b: (b, 0, 0)),
        compiler_params=pltpu.CompilerParams(
            dimension_semantics=("parallel",)),
    )(x_flat, U, masks, w1m, s1c, b1c, w2m, s2c, b2c)

    # Already channel-major: plain reshape gives NCHW, no transpose needed.
    return out.reshape(B, Cout, H2, W2)


# ------------------------------------------------------------------ reference (pure JAX)
def up_forward_ref(x_nchw, params):
    B, Cin, H, W = x_nchw.shape
    H2, W2 = 2 * H, 2 * W
    w1, s1, b1, w2, s2, b2 = params
    A = jnp.asarray(_bilinear_matrix(H, H2))
    Bw = jnp.asarray(_bilinear_matrix(W, W2))
    x = jnp.transpose(x_nchw, (0, 2, 3, 1)).astype(jnp.float32)
    up = jnp.einsum('ip,bpwc->biwc', A, x)
    up = jnp.einsum('jq,biqc->bijc', Bw, up)

    def conv_bn_relu(h, w, s, b):
        y = jax.lax.conv_general_dilated(
            h, w, window_strides=(1, 1), padding='SAME',
            dimension_numbers=('NHWC', 'HWIO', 'NHWC'))
        y = y * s.reshape(1, 1, 1, -1) + b.reshape(1, 1, 1, -1)
        return jnp.maximum(y, 0.0)

    h = conv_bn_relu(up, w1, s1, b1)
    h = conv_bn_relu(h, w2, s2, b2)
    return jnp.transpose(h, (0, 3, 1, 2))


# ------------------------------------------------------------------ main
if __name__ == "__main__":
    # Up(in_channels=4, out_channels=8, bilinear=True) -> DoubleConv(4, 8)
    B, Cin, H, W = 2, 4, 16, 16
    Cmid = Cout = 8

    key = jax.random.PRNGKey(0)
    k = jax.random.split(key, 10)

    x = jax.random.normal(k[0], (B, Cin, H, W), jnp.float32)

    # Conv weights stored HWIO: (kh, kw, Cin, Cout).
    w1 = 0.1 * jax.random.normal(k[1], (3, 3, Cin, Cmid), jnp.float32)
    w2 = 0.1 * jax.random.normal(k[2], (3, 3, Cmid, Cout), jnp.float32)

    # BatchNorm parameters / running stats (eval mode), folded to scale/bias.
    g1 = 1.0 + 0.1 * jax.random.normal(k[3], (Cmid,), jnp.float32)
    be1 = 0.1 * jax.random.normal(k[4], (Cmid,), jnp.float32)
    rm1 = 0.1 * jax.random.normal(k[5], (Cmid,), jnp.float32)
    rv1 = 1.0 + 0.1 * jax.random.uniform(k[6], (Cmid,), jnp.float32)
    g2 = 1.0 + 0.1 * jax.random.normal(k[7], (Cout,), jnp.float32)
    be2 = 0.1 * jax.random.normal(k[8], (Cout,), jnp.float32)
    rm2 = 0.1 * jax.random.normal(k[9], (Cout,), jnp.float32)
    rv2 = 1.0 + 0.05 * jnp.ones((Cout,), jnp.float32)

    s1, b1 = fold_bn(g1, be1, rm1, rv1)
    s2, b2 = fold_bn(g2, be2, rm2, rv2)
    params = (w1, s1, b1, w2, s2, b2)

    out = up_forward(x, params)
    out = jax.block_until_ready(out)

    ref = up_forward_ref(x, params)
    assert out.shape == (B, Cout, 2 * H, 2 * W), out.shape
    assert jnp.allclose(out, ref, atol=1e-3, rtol=1e-3), "mismatch vs JAX reference"

    print("KERNEL_OK")
</pallas_src>

<mosaic_0001>
module attributes {stable_mosaic.version = 11 : i64} {
  func.func @_up_doubleconv_kernel(%arg0: i32, %arg1: memref<1x4x256xf32, #tpu.memory_space<vmem>>, %arg2: memref<256x1024xf32, #tpu.memory_space<vmem>>, %arg3: memref<9x1024xf32, #tpu.memory_space<vmem>>, %arg4: memref<8x36xf32, #tpu.memory_space<vmem>>, %arg5: memref<8x1xf32, #tpu.memory_space<vmem>>, %arg6: memref<8x1xf32, #tpu.memory_space<vmem>>, %arg7: memref<8x72xf32, #tpu.memory_space<vmem>>, %arg8: memref<8x1xf32, #tpu.memory_space<vmem>>, %arg9: memref<8x1xf32, #tpu.memory_space<vmem>>, %arg10: memref<1x8x1024xf32, #tpu.memory_space<vmem>>) attributes {dimension_semantics = [#tpu.dimension_semantics<parallel>], iteration_bounds = array<i64: 2>, scalar_prefetch = 0 : i64, scratch_operands = 0 : i64, tpu.core_type = #tpu.core_type<tc>, window_params = [{transform_indices = @transform_0, window_bounds = array<i64: 1, 4, 256>}, {pipeline_mode = #tpu.pipeline_mode<synchronous>, transform_indices = @transform_1, window_bounds = array<i64: 256, 1024>}, {pipeline_mode = #tpu.pipeline_mode<synchronous>, transform_indices = @transform_2, window_bounds = array<i64: 9, 1024>}, {pipeline_mode = #tpu.pipeline_mode<synchronous>, transform_indices = @transform_3, window_bounds = array<i64: 8, 36>}, {pipeline_mode = #tpu.pipeline_mode<synchronous>, transform_indices = @transform_4, window_bounds = array<i64: 8, 1>}, {pipeline_mode = #tpu.pipeline_mode<synchronous>, transform_indices = @transform_5, window_bounds = array<i64: 8, 1>}, {pipeline_mode = #tpu.pipeline_mode<synchronous>, transform_indices = @transform_6, window_bounds = array<i64: 8, 72>}, {pipeline_mode = #tpu.pipeline_mode<synchronous>, transform_indices = @transform_7, window_bounds = array<i64: 8, 1>}, {pipeline_mode = #tpu.pipeline_mode<synchronous>, transform_indices = @transform_8, window_bounds = array<i64: 8, 1>}, {transform_indices = @transform_9, window_bounds = array<i64: 1, 8, 1024>}]} {
    %c0 = arith.constant 0 : index
    %c0_0 = arith.constant 0 : index
    %c0_1 = arith.constant 0 : index
    %0 = vector.load %arg1[%c0, %c0_0, %c0_1] : memref<1x4x256xf32, #tpu.memory_space<vmem>>, vector<1x4x256xf32>
    %1 = vector.shape_cast %0 : vector<1x4x256xf32> to vector<4x256xf32>
    %c0_2 = arith.constant 0 : index
    %c0_3 = arith.constant 0 : index
    %2 = vector.load %arg3[%c0_2, %c0_3] : memref<9x1024xf32, #tpu.memory_space<vmem>>, vector<9x1024xf32>
    %c0_4 = arith.constant 0 : index
    %c0_5 = arith.constant 0 : index
    %3 = vector.load %arg2[%c0_4, %c0_5] : memref<256x1024xf32, #tpu.memory_space<vmem>>, vector<256x1024xf32>
    %cst = arith.constant dense<0.000000e+00> : vector<4x1024xf32>
    %4 = tpu.matmul %1, %3, %cst {dimension_numbers = #tpu.dot_dimension_numbers<[1], [0], [0], [1], [0, 0, 1, 1], [], []>} : vector<4x256xf32>, vector<256x1024xf32>, vector<4x1024xf32> -> vector<4x1024xf32>
    %5 = vector.extract_strided_slice %4 {offsets = [0, 991], sizes = [4, 33], strides = [1, 1]} : vector<4x1024xf32> to vector<4x33xf32>
    %6 = vector.extract_strided_slice %4 {offsets = [0, 0], sizes = [4, 991], strides = [1, 1]} : vector<4x1024xf32> to vector<4x991xf32>
    %7 = tpu.concatenate %5, %6 in 1 : vector<4x33xf32>, vector<4x991xf32> -> vector<4x1024xf32>
    %8 = vector.extract_strided_slice %2 {offsets = [0, 0], sizes = [1, 1024], strides = [1, 1]} : vector<9x1024xf32> to vector<1x1024xf32>
    %9 = vector.broadcast %8 : vector<1x1024xf32> to vector<4x1024xf32>
    %10 = arith.mulf %7, %9 : vector<4x1024xf32>
    %11 = vector.extract_strided_slice %4 {offsets = [0, 992], sizes = [4, 32], strides = [1, 1]} : vector<4x1024xf32> to vector<4x32xf32>
    %12 = vector.extract_strided_slice %4 {offsets = [0, 0], sizes = [4, 992], strides = [1, 1]} : vector<4x1024xf32> to vector<4x992xf32>
    %13 = tpu.concatenate %11, %12 in 1 : vector<4x32xf32>, vector<4x992xf32> -> vector<4x1024xf32>
    %14 = vector.extract_strided_slice %2 {offsets = [1, 0], sizes = [1, 1024], strides = [1, 1]} : vector<9x1024xf32> to vector<1x1024xf32>
    %15 = vector.broadcast %14 : vector<1x1024xf32> to vector<4x1024xf32>
    %16 = arith.mulf %13, %15 : vector<4x1024xf32>
    %17 = vector.extract_strided_slice %4 {offsets = [0, 993], sizes = [4, 31], strides = [1, 1]} : vector<4x1024xf32> to vector<4x31xf32>
    %18 = vector.extract_strided_slice %4 {offsets = [0, 0], sizes = [4, 993], strides = [1, 1]} : vector<4x1024xf32> to vector<4x993xf32>
    %19 = tpu.concatenate %17, %18 in 1 : vector<4x31xf32>, vector<4x993xf32> -> vector<4x1024xf32>
    %20 = vector.extract_strided_slice %2 {offsets = [2, 0], sizes = [1, 1024], strides = [1, 1]} : vector<9x1024xf32> to vector<1x1024xf32>
    %21 = vector.broadcast %20 : vector<1x1024xf32> to vector<4x1024xf32>
    %22 = arith.mulf %19, %21 : vector<4x1024xf32>
    %23 = vector.extract_strided_slice %4 {offsets = [0, 1023], sizes = [4, 1], strides = [1, 1]} : vector<4x1024xf32> to vector<4x1xf32>
    %24 = vector.extract_strided_slice %4 {offsets = [0, 0], sizes = [4, 1023], strides = [1, 1]} : vector<4x1024xf32> to vector<4x1023xf32>
    %25 = tpu.concatenate %23, %24 in 1 : vector<4x1xf32>, vector<4x1023xf32> -> vector<4x1024xf32>
    %26 = vector.extract_strided_slice %2 {offsets = [3, 0], sizes = [1, 1024], strides = [1, 1]} : vector<9x1024xf32> to vector<1x1024xf32>
    %27 = vector.broadcast %26 : vector<1x1024xf32> to vector<4x1024xf32>
    %28 = arith.mulf %25, %27 : vector<4x1024xf32>
    %29 = vector.extract_strided_slice %4 {offsets = [0, 1], sizes = [4, 1023], strides = [1, 1]} : vector<4x1024xf32> to vector<4x1023xf32>
    %30 = vector.extract_strided_slice %4 {offsets = [0, 0], sizes = [4, 1], strides = [1, 1]} : vector<4x1024xf32> to vector<4x1xf32>
    %31 = tpu.concatenate %29, %30 in 1 : vector<4x1023xf32>, vector<4x1xf32> -> vector<4x1024xf32>
    %32 = vector.extract_strided_slice %2 {offsets = [5, 0], sizes = [1, 1024], strides = [1, 1]} : vector<9x1024xf32> to vector<1x1024xf32>
    %33 = vector.broadcast %32 : vector<1x1024xf32> to vector<4x1024xf32>
    %34 = arith.mulf %31, %33 : vector<4x1024xf32>
    %35 = vector.extract_strided_slice %4 {offsets = [0, 31], sizes = [4, 993], strides = [1, 1]} : vector<4x1024xf32> to vector<4x993xf32>
    %36 = vector.extract_strided_slice %4 {offsets = [0, 0], sizes = [4, 31], strides = [1, 1]} : vector<4x1024xf32> to vector<4x31xf32>
    %37 = tpu.concatenate %35, %36 in 1 : vector<4x993xf32>, vector<4x31xf32> -> vector<4x1024xf32>
    %38 = vector.extract_strided_slice %2 {offsets = [6, 0], sizes = [1, 1024], strides = [1, 1]} : vector<9x1024xf32> to vector<1x1024xf32>
    %39 = vector.broadcast %38 : vector<1x1024xf32> to vector<4x1024xf32>
    %40 = arith.mulf %37, %39 : vector<4x1024xf32>
    %41 = vector.extract_strided_slice %4 {offsets = [0, 32], sizes = [4, 992], strides = [1, 1]} : vector<4x1024xf32> to vector<4x992xf32>
    %42 = vector.extract_strided_slice %4 {offsets = [0, 0], sizes = [4, 32], strides = [1, 1]} : vector<4x1024xf32> to vector<4x32xf32>
    %43 = tpu.concatenate %41, %42 in 1 : vector<4x992xf32>, vector<4x32xf32> -> vector<4x1024xf32>
    %44 = vector.extract_strided_slice %2 {offsets = [7, 0], sizes = [1, 1024], strides = [1, 1]} : vector<9x1024xf32> to vector<1x1024xf32>
    %45 = vector.broadcast %44 : vector<1x1024xf32> to vector<4x1024xf32>
    %46 = arith.mulf %43, %45 : vector<4x1024xf32>
    %47 = vector.extract_strided_slice %4 {offsets = [0, 33], sizes = [4, 991], strides = [1, 1]} : vector<4x1024xf32> to vector<4x991xf32>
    %48 = vector.extract_strided_slice %4 {offsets = [0, 0], sizes = [4, 33], strides = [1, 1]} : vector<4x1024xf32> to vector<4x33xf32>
    %49 = tpu.concatenate %47, %48 in 1 : vector<4x991xf32>, vector<4x33xf32> -> vector<4x1024xf32>
    %50 = vector.extract_strided_slice %2 {offsets = [8, 0], sizes = [1, 1024], strides = [1, 1]} : vector<9x1024xf32> to vector<1x1024xf32>
    %51 = vector.broadcast %50 : vector<1x1024xf32> to vector<4x1024xf32>
    %52 = arith.mulf %49, %51 : vector<4x1024xf32>
    %53 = tpu.concatenate %10, %16, %22, %28, %4, %34, %40, %46, %52 in 0 : vector<4x1024xf32>, vector<4x1024xf32>, vector<4x1024xf32>, vector<4x1024xf32>, vector<4x1024xf32>, vector<4x1024xf32>, vector<4x1024xf32>, vector<4x1024xf32>, vector<4x1024xf32> -> vector<36x1024xf32>
    %c0_6 = arith.constant 0 : index
    %c0_7 = arith.constant 0 : index
    %54 = vector.load %arg4[%c0_6, %c0_7] : memref<8x36xf32, #tpu.memory_space<vmem>>, vector<8x36xf32>
    %cst_8 = arith.constant dense<0.000000e+00> : vector<8x1024xf32>
    %55 = tpu.matmul %54, %53, %cst_8 {dimension_numbers = #tpu.dot_dimension_numbers<[1], [0], [0], [1], [0, 0, 1, 1], [], []>} : vector<8x36xf32>, vector<36x1024xf32>, vector<8x1024xf32> -> vector<8x1024xf32>
    %c0_9 = arith.constant 0 : index
    %c0_10 = arith.constant 0 : index
    %56 = vector.load %arg5[%c0_9, %c0_10] : memref<8x1xf32, #tpu.memory_space<vmem>>, vector<8x1xf32>
    %57 = vector.broadcast %56 : vector<8x1xf32> to vector<8x1024xf32>
    %58 = arith.mulf %55, %57 : vector<8x1024xf32>
    %c0_11 = arith.constant 0 : index
    %c0_12 = arith.constant 0 : index
    %59 = vector.load %arg6[%c0_11, %c0_12] : memref<8x1xf32, #tpu.memory_space<vmem>>, vector<8x1xf32>
    %60 = vector.broadcast %59 : vector<8x1xf32> to vector<8x1024xf32>
    %61 = arith.addf %58, %60 : vector<8x1024xf32>
    %cst_13 = arith.constant 0.000000e+00 : f32
    %62 = vector.broadcast %cst_13 : f32 to vector<8x1024xf32>
    %63 = arith.maximumf %61, %62 : vector<8x1024xf32>
    %64 = vector.extract_strided_slice %63 {offsets = [0, 991], sizes = [8, 33], strides = [1, 1]} : vector<8x1024xf32> to vector<8x33xf32>
    %65 = vector.extract_strided_slice %63 {offsets = [0, 0], sizes = [8, 991], strides = [1, 1]} : vector<8x1024xf32> to vector<8x991xf32>
    %66 = tpu.concatenate %64, %65 in 1 : vector<8x33xf32>, vector<8x991xf32> -> vector<8x1024xf32>
    %67 = vector.extract_strided_slice %2 {offsets = [0, 0], sizes = [1, 1024], strides = [1, 1]} : vector<9x1024xf32> to vector<1x1024xf32>
    %68 = vector.broadcast %67 : vector<1x1024xf32> to vector<8x1024xf32>
    %69 = arith.mulf %66, %68 : vector<8x1024xf32>
    %70 = vector.extract_strided_slice %63 {offsets = [0, 992], sizes = [8, 32], strides = [1, 1]} : vector<8x1024xf32> to vector<8x32xf32>
    %71 = vector.extract_strided_slice %63 {offsets = [0, 0], sizes = [8, 992], strides = [1, 1]} : vector<8x1024xf32> to vector<8x992xf32>
    %72 = tpu.concatenate %70, %71 in 1 : vector<8x32xf32>, vector<8x992xf32> -> vector<8x1024xf32>
    %73 = vector.extract_strided_slice %2 {offsets = [1, 0], sizes = [1, 1024], strides = [1, 1]} : vector<9x1024xf32> to vector<1x1024xf32>
    %74 = vector.broadcast %73 : vector<1x1024xf32> to vector<8x1024xf32>
    %75 = arith.mulf %72, %74 : vector<8x1024xf32>
    %76 = vector.extract_strided_slice %63 {offsets = [0, 993], sizes = [8, 31], strides = [1, 1]} : vector<8x1024xf32> to vector<8x31xf32>
    %77 = vector.extract_strided_slice %63 {offsets = [0, 0], sizes = [8, 993], strides = [1, 1]} : vector<8x1024xf32> to vector<8x993xf32>
    %78 = tpu.concatenate %76, %77 in 1 : vector<8x31xf32>, vector<8x993xf32> -> vector<8x1024xf32>
    %79 = vector.extract_strided_slice %2 {offsets = [2, 0], sizes = [1, 1024], strides = [1, 1]} : vector<9x1024xf32> to vector<1x1024xf32>
    %80 = vector.broadcast %79 : vector<1x1024xf32> to vector<8x1024xf32>
    %81 = arith.mulf %78, %80 : vector<8x1024xf32>
    %82 = vector.extract_strided_slice %63 {offsets = [0, 1023], sizes = [8, 1], strides = [1, 1]} : vector<8x1024xf32> to vector<8x1xf32>
    %83 = vector.extract_strided_slice %63 {offsets = [0, 0], sizes = [8, 1023], strides = [1, 1]} : vector<8x1024xf32> to vector<8x1023xf32>
    %84 = tpu.concatenate %82, %83 in 1 : vector<8x1xf32>, vector<8x1023xf32> -> vector<8x1024xf32>
    %85 = vector.extract_strided_slice %2 {offsets = [3, 0], sizes = [1, 1024], strides = [1, 1]} : vector<9x1024xf32> to vector<1x1024xf32>
    %86 = vector.broadcast %85 : vector<1x1024xf32> to vector<8x1024xf32>
    %87 = arith.mulf %84, %86 : vector<8x1024xf32>
    %88 = vector.extract_strided_slice %63 {offsets = [0, 1], sizes = [8, 1023], strides = [1, 1]} : vector<8x1024xf32> to vector<8x1023xf32>
    %89 = vector.extract_strided_slice %63 {offsets = [0, 0], sizes = [8, 1], strides = [1, 1]} : vector<8x1024xf32> to vector<8x1xf32>
    %90 = tpu.concatenate %88, %89 in 1 : vector<8x1023xf32>, vector<8x1xf32> -> vector<8x1024xf32>
    %91 = vector.extract_strided_slice %2 {offsets = [5, 0], sizes = [1, 1024], strides = [1, 1]} : vector<9x1024xf32> to vector<1x1024xf32>
    %92 = vector.broadcast %91 : vector<1x1024xf32> to vector<8x1024xf32>
    %93 = arith.mulf %90, %92 : vector<8x1024xf32>
    %94 = vector.extract_strided_slice %63 {offsets = [0, 31], sizes = [8, 993], strides = [1, 1]} : vector<8x1024xf32> to vector<8x993xf32>
    %95 = vector.extract_strided_slice %63 {offsets = [0, 0], sizes = [8, 31], strides = [1, 1]} : vector<8x1024xf32> to vector<8x31xf32>
    %96 = tpu.concatenate %94, %95 in 1 : vector<8x993xf32>, vector<8x31xf32> -> vector<8x1024xf32>
    %97 = vector.extract_strided_slice %2 {offsets = [6, 0], sizes = [1, 1024], strides = [1, 1]} : vector<9x1024xf32> to vector<1x1024xf32>
    %98 = vector.broadcast %97 : vector<1x1024xf32> to vector<8x1024xf32>
    %99 = arith.mulf %96, %98 : vector<8x1024xf32>
    %100 = vector.extract_strided_slice %63 {offsets = [0, 32], sizes = [8, 992], strides = [1, 1]} : vector<8x1024xf32> to vector<8x992xf32>
    %101 = vector.extract_strided_slice %63 {offsets = [0, 0], sizes = [8, 32], strides = [1, 1]} : vector<8x1024xf32> to vector<8x32xf32>
    %102 = tpu.concatenate %100, %101 in 1 : vector<8x992xf32>, vector<8x32xf32> -> vector<8x1024xf32>
    %103 = vector.extract_strided_slice %2 {offsets = [7, 0], sizes = [1, 1024], strides = [1, 1]} : vector<9x1024xf32> to vector<1x1024xf32>
    %104 = vector.broadcast %103 : vector<1x1024xf32> to vector<8x1024xf32>
    %105 = arith.mulf %102, %104 : vector<8x1024xf32>
    %106 = vector.extract_strided_slice %63 {offsets = [0, 33], sizes = [8, 991], strides = [1, 1]} : vector<8x1024xf32> to vector<8x991xf32>
    %107 = vector.extract_strided_slice %63 {offsets = [0, 0], sizes = [8, 33], strides = [1, 1]} : vector<8x1024xf32> to vector<8x33xf32>
    %108 = tpu.concatenate %106, %107 in 1 : vector<8x991xf32>, vector<8x33xf32> -> vector<8x1024xf32>
    %109 = vector.extract_strided_slice %2 {offsets = [8, 0], sizes = [1, 1024], strides = [1, 1]} : vector<9x1024xf32> to vector<1x1024xf32>
    %110 = vector.broadcast %109 : vector<1x1024xf32> to vector<8x1024xf32>
    %111 = arith.mulf %108, %110 : vector<8x1024xf32>
    %112 = tpu.concatenate %69, %75, %81, %87, %63, %93, %99, %105, %111 in 0 : vector<8x1024xf32>, vector<8x1024xf32>, vector<8x1024xf32>, vector<8x1024xf32>, vector<8x1024xf32>, vector<8x1024xf32>, vector<8x1024xf32>, vector<8x1024xf32>, vector<8x1024xf32> -> vector<72x1024xf32>
    %c0_14 = arith.constant 0 : index
    %c0_15 = arith.constant 0 : index
    %113 = vector.load %arg7[%c0_14, %c0_15] : memref<8x72xf32, #tpu.memory_space<vmem>>, vector<8x72xf32>
    %cst_16 = arith.constant dense<0.000000e+00> : vector<8x1024xf32>
    %114 = tpu.matmul %113, %112, %cst_16 {dimension_numbers = #tpu.dot_dimension_numbers<[1], [0], [0], [1], [0, 0, 1, 1], [], []>} : vector<8x72xf32>, vector<72x1024xf32>, vector<8x1024xf32> -> vector<8x1024xf32>
    %c0_17 = arith.constant 0 : index
    %c0_18 = arith.constant 0 : index
    %115 = vector.load %arg8[%c0_17, %c0_18] : memref<8x1xf32, #tpu.memory_space<vmem>>, vector<8x1xf32>
    %116 = vector.broadcast %115 : vector<8x1xf32> to vector<8x1024xf32>
    %117 = arith.mulf %114, %116 : vector<8x1024xf32>
    %c0_19 = arith.constant 0 : index
    %c0_20 = arith.constant 0 : index
    %118 = vector.load %arg9[%c0_19, %c0_20] : memref<8x1xf32, #tpu.memory_space<vmem>>, vector<8x1xf32>
    %119 = vector.broadcast %118 : vector<8x1xf32> to vector<8x1024xf32>
    %120 = arith.addf %117, %119 : vector<8x1024xf32>
    %cst_21 = arith.constant 0.000000e+00 : f32
    %121 = vector.broadcast %cst_21 : f32 to vector<8x1024xf32>
    %122 = arith.maximumf %120, %121 : vector<8x1024xf32>
    %c0_22 = arith.constant 0 : index
    %c0_23 = arith.constant 0 : index
    %c0_24 = arith.constant 0 : index
    %123 = vector.load %arg10[%c0_22, %c0_23, %c0_24] : memref<1x8x1024xf32, #tpu.memory_space<vmem>>, vector<1x8x1024xf32>
    %124 = vector.shape_cast %123 : vector<1x8x1024xf32> to vector<8x1024xf32>
    %125 = vector.shape_cast %122 : vector<8x1024xf32> to vector<1x8x1024xf32>
    tpu.vector_store %arg10[%c0_22, %c0_23, %c0_24], %125 {strides = array<i32>} : memref<1x8x1024xf32, #tpu.memory_space<vmem>>, vector<1x8x1024xf32>,
    return
  }
  func.func @transform_0(%arg0: i32) -> (i32, i32, i32) {
    %c0_i32 = arith.constant 0 : i32
    %c0_i32_0 = arith.constant 0 : i32
    %c0_i32_1 = arith.constant 0 : i32
    return %arg0, %c0_i32, %c0_i32_0 : i32, i32, i32
  }
  func.func @transform_1(%arg0: i32) -> (i32, i32) {
    %c0_i32 = arith.constant 0 : i32
    %c0_i32_0 = arith.constant 0 : i32
    %c0_i32_1 = arith.constant 0 : i32
    return %c0_i32, %c0_i32_0 : i32, i32
  }
  func.func @transform_2(%arg0: i32) -> (i32, i32) {
    %c0_i32 = arith.constant 0 : i32
    %c0_i32_0 = arith.constant 0 : i32
    %c0_i32_1 = arith.constant 0 : i32
    return %c0_i32, %c0_i32_0 : i32, i32
  }
  func.func @transform_3(%arg0: i32) -> (i32, i32) {
    %c0_i32 = arith.constant 0 : i32
    %c0_i32_0 = arith.constant 0 : i32
    %c0_i32_1 = arith.constant 0 : i32
    return %c0_i32, %c0_i32_0 : i32, i32
  }
  func.func @transform_4(%arg0: i32) -> (i32, i32) {
    %c0_i32 = arith.constant 0 : i32
    %c0_i32_0 = arith.constant 0 : i32
    %c0_i32_1 = arith.constant 0 : i32
    return %c0_i32, %c0_i32_0 : i32, i32
  }
  func.func @transform_5(%arg0: i32) -> (i32, i32) {
    %c0_i32 = arith.constant 0 : i32
    %c0_i32_0 = arith.constant 0 : i32
    %c0_i32_1 = arith.constant 0 : i32
    return %c0_i32, %c0_i32_0 : i32, i32
  }
  func.func @transform_6(%arg0: i32) -> (i32, i32) {
    %c0_i32 = arith.constant 0 : i32
    %c0_i32_0 = arith.constant 0 : i32
    %c0_i32_1 = arith.constant 0 : i32
    return %c0_i32, %c0_i32_0 : i32, i32
  }
  func.func @transform_7(%arg0: i32) -> (i32, i32) {
    %c0_i32 = arith.constant 0 : i32
    %c0_i32_0 = arith.constant 0 : i32
    %c0_i32_1 = arith.constant 0 : i32
    return %c0_i32, %c0_i32_0 : i32, i32
  }
  func.func @transform_8(%arg0: i32) -> (i32, i32) {
    %c0_i32 = arith.constant 0 : i32
    %c0_i32_0 = arith.constant 0 : i32
    %c0_i32_1 = arith.constant 0 : i32
    return %c0_i32, %c0_i32_0 : i32, i32
  }
  func.func @transform_9(%arg0: i32) -> (i32, i32, i32) {
    %c0_i32 = arith.constant 0 : i32
    %c0_i32_0 = arith.constant 0 : i32
    %c0_i32_1 = arith.constant 0 : i32
    return %arg0, %c0_i32, %c0_i32_0 : i32, i32, i32
  }
}

</mosaic_0001>

<llo_original>
// kernel: tpu_custom_call.1
$region0: #{tpu_custom_call.1}
  #allocation0 [shape = 'u32[]', space=smem, size = 0x4, offset = 0x4, fixed_abs, tag = 'smem constant byte address 0x4 - core index']
  #allocation1 [shape = 'u32[144,128]{1,0:T(1,128)}', space=vmem, size = 0x12000, scoped, tag = 'internal scratch']
  %s0 = inlined_call_operand.vmem [shape: f32[2,4,256], index: 0, kind: input, shape index: {}]
  %s1 = inlined_call_operand.hbm [shape: f32[256,1024], index: 1, kind: input, shape index: {}]
  %s2 = inlined_call_operand.hbm [shape: f32[9,1024], index: 2, kind: input, shape index: {}]
  %s3 = inlined_call_operand.vmem [shape: f32[8,36], index: 3, kind: input, shape index: {}]
  %s4 = inlined_call_operand.vmem [shape: f32[8,1], index: 4, kind: input, shape index: {}]
  %s5 = inlined_call_operand.vmem [shape: f32[8,1], index: 5, kind: input, shape index: {}]
  %s6 = inlined_call_operand.vmem [shape: f32[8,72], index: 6, kind: input, shape index: {}]
  %s7 = inlined_call_operand.vmem [shape: f32[8,1], index: 7, kind: input, shape index: {}]
  %s8 = inlined_call_operand.vmem [shape: f32[8,1], index: 8, kind: input, shape index: {}]
  %s9 = inlined_call_operand.hbm [shape: f32[2,8,1024], index: 9, kind: output, shape index: {}]
  %s10 = sld [smem:[#allocation0]]
  $region77: #{tpu_custom_call.1} parent=0
    _
  %s12 = ssub.s32 1, %s10
  %s13 = scalar_select 0, %s12, %s10
  $region1: #{tpu_custom_call.1} parent=0
    #allocation2 [shape = 'u8[1048576]{0}', space=vmem, size = 0x100000, scoped, tag = 'input window, operand 1, single buffered']
    #allocation3 [shape = 's32[2]{0}', space=sflag, size = 0x8, scoped, tag = 'scoped memory for tpu_custom_call.1']
    #allocation4 [shape = 's32[2]{0}', space=sflag, size = 0x8, scoped, tag = 'scoped memory for tpu_custom_call.1']
    #allocation5 [shape = 'u8[65536]{0}', space=vmem, size = 0x10000, scoped, tag = 'input window, operand 2, single buffered']
    #allocation6 [shape = 's32[1]{0}', space=sflag, size = 0x4, scoped, tag = 'scoped memory for tpu_custom_call.1']
    #allocation7 [shape = 'u8[65536]{0}', space=vmem, size = 0x10000, scoped, tag = 'output window, operand 0']
    %14 = vsyncpa [#allocation3], 0
    %15 = vsyncpa [#allocation6], 0
    %16 = vsyncpa [#allocation4], 0
    %s17 = scalar_lea.sflag [#allocation4], 1
    %18 = vsyncpa %s17, 0
    loop: start=0, step=1, limit=4
    $region2: #{tpu_custom_call.1} parent=1 // loop_pre_header
      _
    $region3: #{tpu_custom_call.1} parent=1 // loop_header
      %s20 = sphi 0, %s24
      %p21 = scmp.ge.s32.totalorder %s20, 4
      %s30 = sphi 0, %s32
      %s33 = sphi 0, %s30
      %s34 = sphi 0, %s33
      %s50 = sphi 0, %s34
      %s54 = sphi 0, %s54
      %s56 = sphi 0, %s54
      %s57 = sphi 0, %s56
      %s71 = sphi 0, %s57
      %s75 = sphi 0, %s75
      %s77 = sphi 0, %s75
      %s78 = sphi 0, %s77
      %s92 = sphi 0, %s78
      %s96 = sphi 0, %s96
      %s98 = sphi 0, %s96
      %s99 = sphi 0, %s98
      %s113 = sphi 0, %s99
      %s117 = sphi 0, %s117
      %s119 = sphi 0, %s117
      %s120 = sphi 0, %s119
      %s134 = sphi 0, %s120
      %s138 = sphi 0, %s138
      %s140 = sphi 0, %s138
      %s141 = sphi 0, %s140
      %s155 = sphi 0, %s141
      %s159 = sphi 0, %s159
      %s161 = sphi 0, %s159
      %s162 = sphi 0, %s161
      %s176 = sphi 0, %s162
      %s180 = sphi 0, %s180
      %s182 = sphi 0, %s180
      %s183 = sphi 0, %s182
      %s197 = sphi 0, %s183
      %s201 = sphi 0, %s201
      %s203 = sphi 0, %s201
      %s204 = sphi 0, %s203
      %s218 = sphi 0, %s204
      %s224 = sphi 0, %s226
      %s227 = sphi 0, %s224
      %s228 = sphi 0, %s227
      %s244 = sphi 0, %s228
    $region4: #{tpu_custom_call.1} parent=1 // loop_header_branch
      %23 = sbr.rel (%p21) target = $region8
    $region5: #{tpu_custom_call.1} parent=1 // loop_body
      %s25 = ssub.s32 %s20, 1
      %s26 = ssub.s32 %s20, 2
      %s27 = sadd.s32 %s20, 1
      %s28 = ssub.s32 %s20, %s27
      %p29 = scmp.eq.s32.totalorder %s28, 0
      %s31 = sadd.s32 %s30, 1
      %s32 = scalar_select %p29, %s30, %s31
      %p35 = pneg %p29
      %p36 = scmp.eq.s32.totalorder %s20, 1
      %p37 = por %p35, %p36
      %p38 = scmp.ne.s32.totalorder %s30, %s33
      %p39 = scmp.eq.s32.totalorder %s20, 0
      %p40 = por %p38, %p39
      %p41 = scmp.ne.s32.totalorder %s30, %s33
      %p42 = scmp.eq.s32.totalorder %s25, 1
      %p43 = por %p41, %p42
      %p44 = scmp.ne.s32.totalorder %s33, %s34
      %p45 = scmp.eq.s32.totalorder %s25, 0
      %p46 = por %p44, %p45
      %p47 = scmp.ne.s32.totalorder %s33, %s34
      %p48 = scmp.eq.s32.totalorder %s26, 1
      %p49 = por %p47, %p48
      %p51 = scmp.ne.s32.totalorder %s34, %s50
      %p52 = scmp.eq.s32.totalorder %s26, 0
      %p53 = por %p51, %p52
      %s55 = sadd.s32 %s54, 1
      %p58 = scmp.eq.s32.totalorder %s20, 1
      %p59 = scmp.ne.s32.totalorder %s54, %s56
      %p60 = scmp.eq.s32.totalorder %s20, 0
      %p61 = por %p59, %p60
      %p62 = scmp.ne.s32.totalorder %s54, %s56
      %p63 = scmp.eq.s32.totalorder %s25, 1
      %p64 = por %p62, %p63
      %p65 = scmp.ne.s32.totalorder %s56, %s57
      %p66 = scmp.eq.s32.totalorder %s25, 0
      %p67 = por %p65, %p66
      %p68 = scmp.ne.s32.totalorder %s56, %s57
      %p69 = scmp.eq.s32.totalorder %s26, 1
      %p70 = por %p68, %p69
      %p72 = scmp.ne.s32.totalorder %s57, %s71
      %p73 = scmp.eq.s32.totalorder %s26, 0
      %p74 = por %p72, %p73
      %s76 = sadd.s32 %s75, 1
      %p79 = scmp.eq.s32.totalorder %s20, 1
      %p80 = scmp.ne.s32.totalorder %s75, %s77
      %p81 = scmp.eq.s32.totalorder %s20, 0
      %p82 = por %p80, %p81
      %p83 = scmp.ne.s32.totalorder %s75, %s77
      %p84 = scmp.eq.s32.totalorder %s25, 1
      %p85 = por %p83, %p84
      %p86 = scmp.ne.s32.totalorder %s77, %s78
      %p87 = scmp.eq.s32.totalorder %s25, 0
      %p88 = por %p86, %p87
      %p89 = scmp.ne.s32.totalorder %s77, %s78
      %p90 = scmp.eq.s32.totalorder %s26, 1
      %p91 = por %p89, %p90
      %p93 = scmp.ne.s32.totalorder %s78, %s92
      %p94 = scmp.eq.s32.totalorder %s26, 0
      %p95 = por %p93, %p94
      %s97 = sadd.s32 %s96, 1
      %p100 = scmp.eq.s32.totalorder %s20, 1
      %p101 = scmp.ne.s32.totalorder %s96, %s98
      %p102 = scmp.eq.s32.totalorder %s20, 0
      %p103 = por %p101, %p102
      %p104 = scmp.ne.s32.totalorder %s96, %s98
      %p105 = scmp.eq.s32.totalorder %s25, 1
      %p106 = por %p104, %p105
      %p107 = scmp.ne.s32.totalorder %s98, %s99
      %p108 = scmp.eq.s32.totalorder %s25, 0
      %p109 = por %p107, %p108
      %p110 = scmp.ne.s32.totalorder %s98, %s99
      %p111 = scmp.eq.s32.totalorder %s26, 1
      %p112 = por %p110, %p111
      %p114 = scmp.ne.s32.totalorder %s99, %s113
      %p115 = scmp.eq.s32.totalorder %s26, 0
      %p116 = por %p114, %p115
      %s118 = sadd.s32 %s117, 1
      %p121 = scmp.eq.s32.totalorder %s20, 1
      %p122 = scmp.ne.s32.totalorder %s117, %s119
      %p123 = scmp.eq.s32.totalorder %s20, 0
      %p124 = por %p122, %p123
      %p125 = scmp.ne.s32.totalorder %s117, %s119
      %p126 = scmp.eq.s32.totalorder %s25, 1
      %p127 = por %p125, %p126
      %p128 = scmp.ne.s32.totalorder %s119, %s120
      %p129 = scmp.eq.s32.totalorder %s25, 0
      %p130 = por %p128, %p129
      %p131 = scmp.ne.s32.totalorder %s119, %s120
      %p132 = scmp.eq.s32.totalorder %s26, 1
      %p133 = por %p131, %p132
      %p135 = scmp.ne.s32.totalorder %s120, %s134
      %p136 = scmp.eq.s32.totalorder %s26, 0
      %p137 = por %p135, %p136
      %s139 = sadd.s32 %s138, 1
      %p142 = scmp.eq.s32.totalorder %s20, 1
      %p143 = scmp.ne.s32.totalorder %s138, %s140
      %p144 = scmp.eq.s32.totalorder %s20, 0
      %p145 = por %p143, %p144
      %p146 = scmp.ne.s32.totalorder %s138, %s140
      %p147 = scmp.eq.s32.totalorder %s25, 1
      %p148 = por %p146, %p147
      %p149 = scmp.ne.s32.totalorder %s140, %s141
      %p150 = scmp.eq.s32.totalorder %s25, 0
      %p151 = por %p149, %p150
      %p152 = scmp.ne.s32.totalorder %s140, %s141
      %p153 = scmp.eq.s32.totalorder %s26, 1
      %p154 = por %p152, %p153
      %p156 = scmp.ne.s32.totalorder %s141, %s155
      %p157 = scmp.eq.s32.totalorder %s26, 0
      %p158 = por %p156, %p157
      %s160 = sadd.s32 %s159, 1
      %p163 = scmp.eq.s32.totalorder %s20, 1
      %p164 = scmp.ne.s32.totalorder %s159, %s161
      %p165 = scmp.eq.s32.totalorder %s20, 0
      %p166 = por %p164, %p165
      %p167 = scmp.ne.s32.totalorder %s159, %s161
      %p168 = scmp.eq.s32.totalorder %s25, 1
      %p169 = por %p167, %p168
      %p170 = scmp.ne.s32.totalorder %s161, %s162
      %p171 = scmp.eq.s32.totalorder %s25, 0
      %p172 = por %p170, %p171
      %p173 = scmp.ne.s32.totalorder %s161, %s162
      %p174 = scmp.eq.s32.totalorder %s26, 1
      %p175 = por %p173, %p174
      %p177 = scmp.ne.s32.totalorder %s162, %s176
      %p178 = scmp.eq.s32.totalorder %s26, 0
      %p179 = por %p177, %p178
      %s181 = sadd.s32 %s180, 1
      %p184 = scmp.eq.s32.totalorder %s20, 1
      %p185 = scmp.ne.s32.totalorder %s180, %s182
      %p186 = scmp.eq.s32.totalorder %s20, 0
      %p187 = por %p185, %p186
      %p188 = scmp.ne.s32.totalorder %s180, %s182
      %p189 = scmp.eq.s32.totalorder %s25, 1
      %p190 = por %p188, %p189
      %p191 = scmp.ne.s32.totalorder %s182, %s183
      %p192 = scmp.eq.s32.totalorder %s25, 0
      %p193 = por %p191, %p192
      %p194 = scmp.ne.s32.totalorder %s182, %s183
      %p195 = scmp.eq.s32.totalorder %s26, 1
      %p196 = por %p194, %p195
      %p198 = scmp.ne.s32.totalorder %s183, %s197
      %p199 = scmp.eq.s32.totalorder %s26, 0
      %p200 = por %p198, %p199
      %s202 = sadd.s32 %s201, 1
      %p205 = scmp.eq.s32.totalorder %s20, 1
      %p206 = scmp.ne.s32.totalorder %s201, %s203
      %p207 = scmp.eq.s32.totalorder %s20, 0
      %p208 = por %p206, %p207
      %p209 = scmp.ne.s32.totalorder %s201, %s203
      %p210 = scmp.eq.s32.totalorder %s25, 1
      %p211 = por %p209, %p210
      %p212 = scmp.ne.s32.totalorder %s203, %s204
      %p213 = scmp.eq.s32.totalorder %s25, 0
      %p214 = por %p212, %p213
      %p215 = scmp.ne.s32.totalorder %s203, %s204
      %p216 = scmp.eq.s32.totalorder %s26, 1
      %p217 = por %p215, %p216
      %p219 = scmp.ne.s32.totalorder %s204, %s218
      %p220 = scmp.eq.s32.totalorder %s26, 0
      %p221 = por %p219, %p220
      %s222 = ssub.s32 %s20, %s27
      %p223 = scmp.eq.s32.totalorder %s222, 0
      %s225 = sadd.s32 %s224, 1
      %s226 = scalar_select %p223, %s224, %s225
      %p229 = pneg %p223
      %p230 = scmp.eq.s32.totalorder %s20, 1
      %p231 = por %p229, %p230
      %p232 = scmp.ne.s32.totalorder %s224, %s227
      %p233 = scmp.eq.s32.totalorder %s20, 0
      %p234 = por %p232, %p233
      %p235 = scmp.ne.s32.totalorder %s224, %s227
      %p236 = scmp.eq.s32.totalorder %s25, 1
      %p237 = por %p235, %p236
      %p238 = scmp.ne.s32.totalorder %s227, %s228
      %p239 = scmp.eq.s32.totalorder %s25, 0
      %p240 = por %p238, %p239
      %p241 = scmp.ne.s32.totalorder %s227, %s228
      %p242 = scmp.eq.s32.totalorder %s26, 1
      %p243 = por %p241, %p242
      %p245 = scmp.ne.s32.totalorder %s228, %s244
      %p246 = scmp.eq.s32.totalorder %s26, 0
      %p247 = por %p245, %p246
      %p248 = scmp.le.s32.totalorder 1, %s20
      %p249 = scmp.lt.s32.totalorder %s20, 3
      %p250 = pnand %p248, %p249
      %p251 = pneg %p250
      // Predicated region
      $region9: #{tpu_custom_call.1} parent=5 // pred_check
        _
      $region10: #{tpu_custom_call.1} parent=5 // pred_check_branch
        %253 = sbr.rel (%p250) target = $region12
      $region11: #{tpu_custom_call.1} parent=5 // pred_region
        %s254 = ssub.s32 %s20, 1
        // Predicated region
        $region13: #{tpu_custom_call.1} parent=11 // pred_check
          %p255 = pneg %p67
        $region14: #{tpu_custom_call.1} parent=11 // pred_check_branch
          %257 = sbr.rel (%p255) target = $region16
        $region15: #{tpu_custom_call.1} parent=11 // pred_region
          %s259 = ssub.s32 32768, 32768
          %260 = vsyncadd [#allocation3], %s259
          %s261 = sshll.u32 [#allocation2], 4
          %s262 = int_to_ptr.vmem [resolvable:$true] %s261
          %267 = dma.hbm_to_vmem [thread:$0]  %s1, 32768, %s262, [#allocation3], 1024, 1024, 64
        $region16: #{tpu_custom_call.1} parent=11 // pred_fallthru
          _
        // Predicated region
        $region17: #{tpu_custom_call.1} parent=11 // pred_check
          %p268 = pneg %p88
        $region18: #{tpu_custom_call.1} parent=11 // pred_check_branch
          %270 = sbr.rel (%p268) target = $region20
        $region19: #{tpu_custom_call.1} parent=11 // pred_region
          %s272 = ssub.s32 2048, 2048
          %273 = vsyncadd [#allocation6], %s272
          %s274 = sshll.u32 [#allocation5], 4
          %s275 = int_to_ptr.vmem [resolvable:$true] %s274
          %280 = dma.hbm_to_vmem [thread:$0]  %s2, 2048, %s275, [#allocation6], 1024, 1024, 64
        $region20: #{tpu_custom_call.1} parent=11 // pred_fallthru
          _
        // Predicated region
        $region21: #{tpu_custom_call.1} parent=11 // pred_check
          %p281 = pneg %p109
        $region22: #{tpu_custom_call.1} parent=11 // pred_check_branch
          %283 = sbr.rel (%p281) target = $region24
        $region23: #{tpu_custom_call.1} parent=11 // pred_region
          _
        $region24: #{tpu_custom_call.1} parent=11 // pred_fallthru
          _
        // Predicated region
        $region25: #{tpu_custom_call.1} parent=11 // pred_check
          %p284 = pneg %p130
        $region26: #{tpu_custom_call.1} parent=11 // pred_check_branch
          %286 = sbr.rel (%p284) target = $region28
        $region27: #{tpu_custom_call.1} parent=11 // pred_region
          _
        $region28: #{tpu_custom_call.1} parent=11 // pred_fallthru
          _
        // Predicated region
        $region29: #{tpu_custom_call.1} parent=11 // pred_check
          %p287 = pneg %p151
        $region30: #{tpu_custom_call.1} parent=11 // pred_check_branch
          %289 = sbr.rel (%p287) target = $region32
        $region31: #{tpu_custom_call.1} parent=11 // pred_region
          _
        $region32: #{tpu_custom_call.1} parent=11 // pred_fallthru
          _
        // Predicated region
        $region33: #{tpu_custom_call.1} parent=11 // pred_check
          %p290 = pneg %p172
        $region34: #{tpu_custom_call.1} parent=11 // pred_check_branch
          %292 = sbr.rel (%p290) target = $region36
        $region35: #{tpu_custom_call.1} parent=11 // pred_region
          _
        $region36: #{tpu_custom_call.1} parent=11 // pred_fallthru
          _
        // Predicated region
        $region37: #{tpu_custom_call.1} parent=11 // pred_check
          %p293 = pneg %p193
        $region38: #{tpu_custom_call.1} parent=11 // pred_check_branch
          %295 = sbr.rel (%p293) target = $region40
        $region39: #{tpu_custom_call.1} parent=11 // pred_region
          _
        $region40: #{tpu_custom_call.1} parent=11 // pred_fallthru
          _
        // Predicated region
        $region41: #{tpu_custom_call.1} parent=11 // pred_check
          %p296 = pneg %p214
        $region42: #{tpu_custom_call.1} parent=11 // pred_check_branch
          %298 = sbr.rel (%p296) target = $region44
        $region43: #{tpu_custom_call.1} parent=11 // pred_region
          _
        $region44: #{tpu_custom_call.1} parent=11 // pred_fallthru
          _
      $region12: #{tpu_custom_call.1} parent=5 // pred_fallthru
        _
      %p299 = scmp.lt.s32.totalorder %s20, 2
      // Predicated region
      $region45: #{tpu_custom_call.1} parent=5 // pred_check
        %p300 = pneg %p299
      $region46: #{tpu_custom_call.1} parent=5 // pred_check_branch
        %302 = sbr.rel (%p300) target = $region48
      $region47: #{tpu_custom_call.1} parent=5 // pred_region
        // Predicated region
        $region49: #{tpu_custom_call.1} parent=47 // pred_check
          %p303 = pneg %p40
        $region50: #{tpu_custom_call.1} parent=47 // pred_check_branch
          %305 = sbr.rel (%p303) target = $region52
        $region51: #{tpu_custom_call.1} parent=47 // pred_region
          %p306 = scmp.lt.s32.totalorder %s20, 1
          %s307 = scalar_select %p306, %s20, 1
          %s308 = smul.addr %s307, 2
          %s309 = smul.addr %s308, 4
          %s310 = scalar_lea.vmem %s0, %s309
        $region52: #{tpu_custom_call.1} parent=47 // pred_fallthru
          _
      $region48: #{tpu_custom_call.1} parent=5 // pred_fallthru
        _
      %p311 = scmp.le.s32.totalorder 1, %s20
      %p312 = scmp.lt.s32.totalorder %s20, 3
      %p313 = pnand %p311, %p312
      %p314 = pneg %p313
      // Predicated region
      $region53: #{tpu_custom_call.1} parent=5 // pred_check
        _
      $region54: #{tpu_custom_call.1} parent=5 // pred_check_branch
        %316 = sbr.rel (%p313) target = $region56
      $region55: #{tpu_custom_call.1} parent=5 // pred_region
        %s317 = ssub.s32 %s20, 1
        // Predicated region
        $region57: #{tpu_custom_call.1} parent=55 // pred_check
          %p318 = pneg %p67
        $region58: #{tpu_custom_call.1} parent=55 // pred_check_branch
          %320 = sbr.rel (%p318) target = $region60
        $region59: #{tpu_custom_call.1} parent=55 // pred_region
          %321 = dma.done [#allocation3], 32768
        $region60: #{tpu_custom_call.1} parent=55 // pred_fallthru
          _
        // Predicated region
        $region61: #{tpu_custom_call.1} parent=55 // pred_check
          %p322 = pneg %p88
        $region62: #{tpu_custom_call.1} parent=55 // pred_check_branch
          %324 = sbr.rel (%p322) target = $region64
        $region63: #{tpu_custom_call.1} parent=55 // pred_region
          %325 = dma.done [#allocation6], 2048
        $region64: #{tpu_custom_call.1} parent=55 // pred_fallthru
          _
        %p326 = scmp.lt.s32.totalorder %s25, 1
        %s327 = scalar_select %p326, %s25, 1
        %s328 = smul.addr %s327, 2
        %s329 = smul.addr %s328, 4
        %s330 = scalar_lea.vmem %s0, %s329
        %p331 = pneg %p46
        %p332 = pneg %p43
        %p333 = pneg %p67
        %p334 = pneg %p64
        %p335 = pneg %p88
        %p336 = pneg %p85
        %p337 = pneg %p109
        %p338 = pneg %p106
        %p339 = pneg %p130
        %p340 = pneg %p127
        %p341 = pneg %p151
        %p342 = pneg %p148
        %p343 = pneg %p172
        %p344 = pneg %p169
        %p345 = pneg %p193
        %p346 = pneg %p190
        %p347 = pneg %p214
        %p348 = pneg %p211
        %p349 = pneg %p240
        %p350 = pneg %p237
        %s351 = sand.u32 %s227, 1
        %s352 = scalar_lea.sflag [#allocation4], %s351
        %s353 = sand.u32 %s227, 1
        %s354 = smul.addr %s353, 64
        %s355 = scalar_lea.vmem [#allocation7], %s354
        %p356 = scmp.lt.s32.totalorder %s25, 1
        %s357 = scalar_select %p356, %s25, 1
        %s358 = smul.addr %s357, 2
        %s359 = smul.addr %s358, 4
        %s360 = scalar_lea.vmem %s0, %s359
        %v361 = vld [vmem:[%s360] sm:$0xff]
        %v362 = vld [vmem:[#allocation5] sm:$0xff]
        %v363 = vld [vmem:[#allocation5 + $0x8] sm:$0xff]
        %v364 = vld [vmem:[#allocation5 + $0x10] sm:$0xff]
        %v365 = vld [vmem:[#allocation5 + $0x18] sm:$0xff]
        %v366 = vld [vmem:[#allocation5 + $0x20] sm:$0xff]
        %v367 = vld [vmem:[#allocation5 + $0x28] sm:$0xff]
        %v368 = vld [vmem:[#allocation5 + $0x30] sm:$0xff]
        %v369 = vld [vmem:[#allocation5 + $0x38] sm:$0xff]
        %v370 = vld [vmem:[#allocation5 + $0x40] sm:$0x1]
        %v371 = vld [vmem:[#allocation5 + $0x48] sm:$0x1]
        %v372 = vld [vmem:[#allocation5 + $0x50] sm:$0x1]
        %v373 = vld [vmem:[#allocation5 + $0x58] sm:$0x1]
        %v374 = vld [vmem:[#allocation5 + $0x60] sm:$0x1]
        %v375 = vld [vmem:[#allocation5 + $0x68] sm:$0x1]
        %v376 = vld [vmem:[#allocation5 + $0x70] sm:$0x1]
        %v377 = vld [vmem:[#allocation5 + $0x78] sm:$0x1]
        %v378 = vld [vmem:[#allocation2] sm:$0xff]
        %v379 = vld [vmem:[#allocation2 + $0x8] sm:$0xff]
        %v380 = vld [vmem:[#allocation2 + $0x10] sm:$0xff]
        %v381 = vld [vmem:[#allocation2 + $0x18] sm:$0xff]
        %v382 = vld [vmem:[#allocation2 + $0x20] sm:$0xff]
        %v383 = vld [vmem:[#allocation2 + $0x28] sm:$0xff]
        %v384 = vld [vmem:[#allocation2 + $0x30] sm:$0xff]
        %v385 = vld [vmem:[#allocation2 + $0x38] sm:$0xff]
        %v386 = vld [vmem:[#allocation2 + $0x40] sm:$0xff]
        %v387 = vld [vmem:[#allocation2 + $0x48] sm:$0xff]
        %v388 = vld [vmem:[#allocation2 + $0x50] sm:$0xff]
        %v389 = vld [vmem:[#allocation2 + $0x58] sm:$0xff]
        %v390 = vld [vmem:[#allocation2 + $0x60] sm:$0xff]
        %v391 = vld [vmem:[#allocation2 + $0x68] sm:$0xff]
        %v392 = vld [vmem:[#allocation2 + $0x70] sm:$0xff]
        %v393 = vld [vmem:[#allocation2 + $0x78] sm:$0xff]
        %v394 = vld [vmem:[#allocation2 + $0x80] sm:$0xff]
        %v395 = vld [vmem:[#allocation2 + $0x88] sm:$0xff]
        %v396 = vld [vmem:[#allocation2 + $0x90] sm:$0xff]
        %v397 = vld [vmem:[#allocation2 + $0x98] sm:$0xff]
        %v398 = vld [vmem:[#allocation2 + $0xa0] sm:$0xff]
        %v399 = vld [vmem:[#allocation2 + $0xa8] sm:$0xff]
        %v400 = vld [vmem:[#allocation2 + $0xb0] sm:$0xff]
        %v401 = vld [vmem:[#allocation2 + $0xb8] sm:$0xff]
        %v402 = vld [vmem:[#allocation2 + $0xc0] sm:$0xff]
        %v403 = vld [vmem:[#allocation2 + $0xc8] sm:$0xff]
        %v404 = vld [vmem:[#allocation2 + $0xd0] sm:$0xff]
        %v405 = vld [vmem:[#allocation2 + $0xd8] sm:$0xff]
        %v406 = vld [vmem:[#allocation2 + $0xe0] sm:$0xff]
        %v407 = vld [vmem:[#allocation2 + $0xe8] sm:$0xff]
        %v408 = vld [vmem:[#allocation2 + $0xf0] sm:$0xff]
        %v409 = vld [vmem:[#allocation2 + $0xf8] sm:$0xff]
        %v410 = vld [vmem:[#allocation2 + $0x100] sm:$0xff]
        %v411 = vld [vmem:[#allocation2 + $0x108] sm:$0xff]
        %v412 = vld [vmem:[#allocation2 + $0x110] sm:$0xff]
        %v413 = vld [vmem:[#allocation2 + $0x118] sm:$0xff]
        %v414 = vld [vmem:[#allocation2 + $0x120] sm:$0xff]
        %v415 = vld [vmem:[#allocation2 + $0x128] sm:$0xff]
        %v416 = vld [vmem:[#allocation2 + $0x130] sm:$0xff]
        %v417 = vld [vmem:[#allocation2 + $0x138] sm:$0xff]
        %v418 = vld [vmem:[#allocation2 + $0x140] sm:$0xff]
        %v419 = vld [vmem:[#allocation2 + $0x148] sm:$0xff]
        %v420 = vld [vmem:[#allocation2 + $0x150] sm:$0xff]
        %v421 = vld [vmem:[#allocation2 + $0x158] sm:$0xff]
        %v422 = vld [vmem:[#allocation2 + $0x160] sm:$0xff]
        %v423 = vld [vmem:[#allocation2 + $0x168] sm:$0xff]
        %v424 = vld [vmem:[#allocation2 + $0x170] sm:$0xff]
        %v425 = vld [vmem:[#allocation2 + $0x178] sm:$0xff]
        %v426 = vld [vmem:[#allocation2 + $0x180] sm:$0xff]
        %v427 = vld [vmem:[#allocation2 + $0x188] sm:$0xff]
        %v428 = vld [vmem:[#allocation2 + $0x190] sm:$0xff]
        %v429 = vld [vmem:[#allocation2 + $0x198] sm:$0xff]
        %v430 = vld [vmem:[#allocation2 + $0x1a0] sm:$0xff]
        %v431 = vld [vmem:[#allocation2 + $0x1a8] sm:$0xff]
        %v432 = vld [vmem:[#allocation2 + $0x1b0] sm:$0xff]
        %v433 = vld [vmem:[#allocation2 + $0x1b8] sm:$0xff]
        %v434 = vld [vmem:[#allocation2 + $0x1c0] sm:$0xff]
        %v435 = vld [vmem:[#allocation2 + $0x1c8] sm:$0xff]
        %v436 = vld [vmem:[#allocation2 + $0x1d0] sm:$0xff]
        %v437 = vld [vmem:[#allocation2 + $0x1d8] sm:$0xff]
        %v438 = vld [vmem:[#allocation2 + $0x1e0] sm:$0xff]
        %v439 = vld [vmem:[#allocation2 + $0x1e8] sm:$0xff]
        %v440 = vld [vmem:[#allocation2 + $0x1f0] sm:$0xff]
        %v441 = vld [vmem:[#allocation2 + $0x1f8] sm:$0xff]
        %v442 = vld [vmem:[#allocation2 + $0x200] sm:$0xff]
        %v443 = vld [vmem:[#allocation2 + $0x208] sm:$0xff]
        %v444 = vld [vmem:[#allocation2 + $0x210] sm:$0xff]
        %v445 = vld [vmem:[#allocation2 + $0x218] sm:$0xff]
        %v446 = vld [vmem:[#allocation2 + $0x220] sm:$0xff]
        %v447 = vld [vmem:[#allocation2 + $0x228] sm:$0xff]
        %v448 = vld [vmem:[#allocation2 + $0x230] sm:$0xff]
        %v449 = vld [vmem:[#allocation2 + $0x238] sm:$0xff]
        %v450 = vld [vmem:[#allocation2 + $0x240] sm:$0xff]
        %v451 = vld [vmem:[#allocation2 + $0x248] sm:$0xff]
        %v452 = vld [vmem:[#allocation2 + $0x250] sm:$0xff]
        %v453 = vld [vmem:[#allocation2 + $0x258] sm:$0xff]
        %v454 = vld [vmem:[#allocation2 + $0x260] sm:$0xff]
        %v455 = vld [vmem:[#allocation2 + $0x268] sm:$0xff]
        %v456 = vld [vmem:[#allocation2 + $0x270] sm:$0xff]
        %v457 = vld [vmem:[#allocation2 + $0x278] sm:$0xff]
        %v458 = vld [vmem:[#allocation2 + $0x280] sm:$0xff]
        %v459 = vld [vmem:[#allocation2 + $0x288] sm:$0xff]
        %v460 = vld [vmem:[#allocation2 + $0x290] sm:$0xff]
        %v461 = vld [vmem:[#allocation2 + $0x298] sm:$0xff]
        %v462 = vld [vmem:[#allocation2 + $0x2a0] sm:$0xff]
        %v463 = vld [vmem:[#allocation2 + $0x2a8] sm:$0xff]
        %v464 = vld [vmem:[#allocation2 + $0x2b0] sm:$0xff]
        %v465 = vld [vmem:[#allocation2 + $0x2b8] sm:$0xff]
        %v466 = vld [vmem:[#allocation2 + $0x2c0] sm:$0xff]
        %v467 = vld [vmem:[#allocation2 + $0x2c8] sm:$0xff]
        %v468 = vld [vmem:[#allocation2 + $0x2d0] sm:$0xff]
        %v469 = vld [vmem:[#allocation2 + $0x2d8] sm:$0xff]
        %v470 = vld [vmem:[#allocation2 + $0x2e0] sm:$0xff]
        %v471 = vld [vmem:[#allocation2 + $0x2e8] sm:$0xff]
        %v472 = vld [vmem:[#allocation2 + $0x2f0] sm:$0xff]
        %v473 = vld [vmem:[#allocation2 + $0x2f8] sm:$0xff]
        %v474 = vld [vmem:[#allocation2 + $0x300] sm:$0xff]
        %v475 = vld [vmem:[#allocation2 + $0x308] sm:$0xff]
        %v476 = vld [vmem:[#allocation2 + $0x310] sm:$0xff]
        %v477 = vld [vmem:[#allocation2 + $0x318] sm:$0xff]
        %v478 = vld [vmem:[#allocation2 + $0x320] sm:$0xff]
        %v479 = vld [vmem:[#allocation2 + $0x328] sm:$0xff]
        %v480 = vld [vmem:[#allocation2 + $0x330] sm:$0xff]
        %v481 = vld [vmem:[#allocation2 + $0x338] sm:$0xff]
        %v482 = vld [vmem:[#allocation2 + $0x340] sm:$0xff]
        %v483 = vld [vmem:[#allocation2 + $0x348] sm:$0xff]
        %v484 = vld [vmem:[#allocation2 + $0x350] sm:$0xff]
        %v485 = vld [vmem:[#allocation2 + $0x358] sm:$0xff]
        %v486 = vld [vmem:[#allocation2 + $0x360] sm:$0xff]
        %v487 = vld [vmem:[#allocation2 + $0x368] sm:$0xff]
        %v488 = vld [vmem:[#allocation2 + $0x370] sm:$0xff]
        %v489 = vld [vmem:[#allocation2 + $0x378] sm:$0xff]
        %v490 = vld [vmem:[#allocation2 + $0x380] sm:$0xff]
        %v491 = vld [vmem:[#allocation2 + $0x388] sm:$0xff]
        %v492 = vld [vmem:[#allocation2 + $0x390] sm:$0xff]
        %v493 = vld [vmem:[#allocation2 + $0x398] sm:$0xff]
        %v494 = vld [vmem:[#allocation2 + $0x3a0] sm:$0xff]
        %v495 = vld [vmem:[#allocation2 + $0x3a8] sm:$0xff]
        %v496 = vld [vmem:[#allocation2 + $0x3b0] sm:$0xff]
        %v497 = vld [vmem:[#allocation2 + $0x3b8] sm:$0xff]
        %v498 = vld [vmem:[#allocation2 + $0x3c0] sm:$0xff]
        %v499 = vld [vmem:[#allocation2 + $0x3c8] sm:$0xff]
        %v500 = vld [vmem:[#allocation2 + $0x3d0] sm:$0xff]
        %v501 = vld [vmem:[#allocation2 + $0x3d8] sm:$0xff]
        %v502 = vld [vmem:[#allocation2 + $0x3e0] sm:$0xff]
        %v503 = vld [vmem:[#allocation2 + $0x3e8] sm:$0xff]
        %v504 = vld [vmem:[#allocation2 + $0x3f0] sm:$0xff]
        %v505 = vld [vmem:[#allocation2 + $0x3f8] sm:$0xff]
        %v506 = vld [vmem:[#allocation2 + $0x400] sm:$0xff]
        %v507 = vld [vmem:[#allocation2 + $0x408] sm:$0xff]
        %v508 = vld [vmem:[#allocation2 + $0x410] sm:$0xff]
        %v509 = vld [vmem:[#allocation2 + $0x418] sm:$0xff]
        %v510 = vld [vmem:[#allocation2 + $0x420] sm:$0xff]
        %v511 = vld [vmem:[#allocation2 + $0x428] sm:$0xff]
        %v512 = vld [vmem:[#allocation2 + $0x430] sm:$0xff]
        %v513 = vld [vmem:[#allocation2 + $0x438] sm:$0xff]
        %v514 = vld [vmem:[#allocation2 + $0x440] sm:$0xff]
        %v515 = vld [vmem:[#allocation2 + $0x448] sm:$0xff]
        %v516 = vld [vmem:[#allocation2 + $0x450] sm:$0xff]
        %v517 = vld [vmem:[#allocation2 + $0x458] sm:$0xff]
        %v518 = vld [vmem:[#allocation2 + $0x460] sm:$0xff]
        %v519 = vld [vmem:[#allocation2 + $0x468] sm:$0xff]
        %v520 = vld [vmem:[#allocation2 + $0x470] sm:$0xff]
        %v521 = vld [vmem:[#allocation2 + $0x478] sm:$0xff]
        %v522 = vld [vmem:[#allocation2 + $0x480] sm:$0xff]
        %v523 = vld [vmem:[#allocation2 + $0x488] sm:$0xff]
        %v524 = vld [vmem:[#allocation2 + $0x490] sm:$0xff]
        %v525 = vld [vmem:[#allocation2 + $0x498] sm:$0xff]
        %v526 = vld [vmem:[#allocation2 + $0x4a0] sm:$0xff]
        %v527 = vld [vmem:[#allocation2 + $0x4a8] sm:$0xff]
        %v528 = vld [vmem:[#allocation2 + $0x4b0] sm:$0xff]
        %v529 = vld [vmem:[#allocation2 + $0x4b8] sm:$0xff]
        %v530 = vld [vmem:[#allocation2 + $0x4c0] sm:$0xff]
        %v531 = vld [vmem:[#allocation2 + $0x4c8] sm:$0xff]
        %v532 = vld [vmem:[#allocation2 + $0x4d0] sm:$0xff]
        %v533 = vld [vmem:[#allocation2 + $0x4d8] sm:$0xff]
        %v534 = vld [vmem:[#allocation2 + $0x4e0] sm:$0xff]
        %v535 = vld [vmem:[#allocation2 + $0x4e8] sm:$0xff]
        %v536 = vld [vmem:[#allocation2 + $0x4f0] sm:$0xff]
        %v537 = vld [vmem:[#allocation2 + $0x4f8] sm:$0xff]
        %v538 = vld [vmem:[#allocation2 + $0x500] sm:$0xff]
        %v539 = vld [vmem:[#allocation2 + $0x508] sm:$0xff]
        %v540 = vld [vmem:[#allocation2 + $0x510] sm:$0xff]
        %v541 = vld [vmem:[#allocation2 + $0x518] sm:$0xff]
        %v542 = vld [vmem:[#allocation2 + $0x520] sm:$0xff]
        %v543 = vld [vmem:[#allocation2 + $0x528] sm:$0xff]
        %v544 = vld [vmem:[#allocation2 + $0x530] sm:$0xff]
        %v545 = vld [vmem:[#allocation2 + $0x538] sm:$0xff]
        %v546 = vld [vmem:[#allocation2 + $0x540] sm:$0xff]
        %v547 = vld [vmem:[#allocation2 + $0x548] sm:$0xff]
        %v548 = vld [vmem:[#allocation2 + $0x550] sm:$0xff]
        %v549 = vld [vmem:[#allocation2 + $0x558] sm:$0xff]
        %v550 = vld [vmem:[#allocation2 + $0x560] sm:$0xff]
        %v551 = vld [vmem:[#allocation2 + $0x568] sm:$0xff]
        %v552 = vld [vmem:[#allocation2 + $0x570] sm:$0xff]
        %v553 = vld [vmem:[#allocation2 + $0x578] sm:$0xff]
        %v554 = vld [vmem:[#allocation2 + $0x580] sm:$0xff]
        %v555 = vld [vmem:[#allocation2 + $0x588] sm:$0xff]
        %v556 = vld [vmem:[#allocation2 + $0x590] sm:$0xff]
        %v557 = vld [vmem:[#allocation2 + $0x598] sm:$0xff]
        %v558 = vld [vmem:[#allocation2 + $0x5a0] sm:$0xff]
        %v559 = vld [vmem:[#allocation2 + $0x5a8] sm:$0xff]
        %v560 = vld [vmem:[#allocation2 + $0x5b0] sm:$0xff]
        %v561 = vld [vmem:[#allocation2 + $0x5b8] sm:$0xff]
        %v562 = vld [vmem:[#allocation2 + $0x5c0] sm:$0xff]
        %v563 = vld [vmem:[#allocation2 + $0x5c8] sm:$0xff]
        %v564 = vld [vmem:[#allocation2 + $0x5d0] sm:$0xff]
        %v565 = vld [vmem:[#allocation2 + $0x5d8] sm:$0xff]
        %v566 = vld [vmem:[#allocation2 + $0x5e0] sm:$0xff]
        %v567 = vld [vmem:[#allocation2 + $0x5e8] sm:$0xff]
        %v568 = vld [vmem:[#allocation2 + $0x5f0] sm:$0xff]
        %v569 = vld [vmem:[#allocation2 + $0x5f8] sm:$0xff]
        %v570 = vld [vmem:[#allocation2 + $0x600] sm:$0xff]
        %v571 = vld [vmem:[#allocation2 + $0x608] sm:$0xff]
        %v572 = vld [vmem:[#allocation2 + $0x610] sm:$0xff]
        %v573 = vld [vmem:[#allocation2 + $0x618] sm:$0xff]
        %v574 = vld [vmem:[#allocation2 + $0x620] sm:$0xff]
        %v575 = vld [vmem:[#allocation2 + $0x628] sm:$0xff]
        %v576 = vld [vmem:[#allocation2 + $0x630] sm:$0xff]
        %v577 = vld [vmem:[#allocation2 + $0x638] sm:$0xff]
        %v578 = vld [vmem:[#allocation2 + $0x640] sm:$0xff]
        %v579 = vld [vmem:[#allocation2 + $0x648] sm:$0xff]
        %v580 = vld [vmem:[#allocation2 + $0x650] sm:$0xff]
        %v581 = vld [vmem:[#allocation2 + $0x658] sm:$0xff]
        %v582 = vld [vmem:[#allocation2 + $0x660] sm:$0xff]
        %v583 = vld [vmem:[#allocation2 + $0x668] sm:$0xff]
        %v584 = vld [vmem:[#allocation2 + $0x670] sm:$0xff]
        %v585 = vld [vmem:[#allocation2 + $0x678] sm:$0xff]
        %v586 = vld [vmem:[#allocation2 + $0x680] sm:$0xff]
        %v587 = vld [vmem:[#allocation2 + $0x688] sm:$0xff]
        %v588 = vld [vmem:[#allocation2 + $0x690] sm:$0xff]
        %v589 = vld [vmem:[#allocation2 + $0x698] sm:$0xff]
        %v590 = vld [vmem:[#allocation2 + $0x6a0] sm:$0xff]
        %v591 = vld [vmem:[#allocation2 + $0x6a8] sm:$0xff]
        %v592 = vld [vmem:[#allocation2 + $0x6b0] sm:$0xff]
        %v593 = vld [vmem:[#allocation2 + $0x6b8] sm:$0xff]
        %v594 = vld [vmem:[#allocation2 + $0x6c0] sm:$0xff]
        %v595 = vld [vmem:[#allocation2 + $0x6c8] sm:$0xff]
        %v596 = vld [vmem:[#allocation2 + $0x6d0] sm:$0xff]
        %v597 = vld [vmem:[#allocation2 + $0x6d8] sm:$0xff]
        %v598 = vld [vmem:[#allocation2 + $0x6e0] sm:$0xff]
        %v599 = vld [vmem:[#allocation2 + $0x6e8] sm:$0xff]
        %v600 = vld [vmem:[#allocation2 + $0x6f0] sm:$0xff]
        %v601 = vld [vmem:[#allocation2 + $0x6f8] sm:$0xff]
        %v602 = vld [vmem:[#allocation2 + $0x700] sm:$0xff]
        %v603 = vld [vmem:[#allocation2 + $0x708] sm:$0xff]
        %v604 = vld [vmem:[#allocation2 + $0x710] sm:$0xff]
        %v605 = vld [vmem:[#allocation2 + $0x718] sm:$0xff]
        %v606 = vld [vmem:[#allocation2 + $0x720] sm:$0xff]
        %v607 = vld [vmem:[#allocation2 + $0x728] sm:$0xff]
        %v608 = vld [vmem:[#allocation2 + $0x730] sm:$0xff]
        %v609 = vld [vmem:[#allocation2 + $0x738] sm:$0xff]
        %v610 = vld [vmem:[#allocation2 + $0x740] sm:$0xff]
        %v611 = vld [vmem:[#allocation2 + $0x748] sm:$0xff]
        %v612 = vld [vmem:[#allocation2 + $0x750] sm:$0xff]
        %v613 = vld [vmem:[#allocation2 + $0x758] sm:$0xff]
        %v614 = vld [vmem:[#allocation2 + $0x760] sm:$0xff]
        %v615 = vld [vmem:[#allocation2 + $0x768] sm:$0xff]
        %v616 = vld [vmem:[#allocation2 + $0x770] sm:$0xff]
        %v617 = vld [vmem:[#allocation2 + $0x778] sm:$0xff]
        %v618 = vld [vmem:[#allocation2 + $0x780] sm:$0xff]
        %v619 = vld [vmem:[#allocation2 + $0x788] sm:$0xff]
        %v620 = vld [vmem:[#allocation2 + $0x790] sm:$0xff]
        %v621 = vld [vmem:[#allocation2 + $0x798] sm:$0xff]
        %v622 = vld [vmem:[#allocation2 + $0x7a0] sm:$0xff]
        %v623 = vld [vmem:[#allocation2 + $0x7a8] sm:$0xff]
        %v624 = vld [vmem:[#allocation2 + $0x7b0] sm:$0xff]
        %v625 = vld [vmem:[#allocation2 + $0x7b8] sm:$0xff]
        %v626 = vld [vmem:[#allocation2 + $0x7c0] sm:$0xff]
        %v627 = vld [vmem:[#allocation2 + $0x7c8] sm:$0xff]
        %v628 = vld [vmem:[#allocation2 + $0x7d0] sm:$0xff]
        %v629 = vld [vmem:[#allocation2 + $0x7d8] sm:$0xff]
        %v630 = vld [vmem:[#allocation2 + $0x7e0] sm:$0xff]
        %v631 = vld [vmem:[#allocation2 + $0x7e8] sm:$0xff]
        %v632 = vld [vmem:[#allocation2 + $0x7f0] sm:$0xff]
        %v633 = vld [vmem:[#allocation2 + $0x7f8] sm:$0xff]
        %v635 = vcombine.high %v361, %v361
        %637 = vmatprep.subr.mxu0 %v379
        %638 = vmatpush1.msra.mxu0 %v378
        %639 = vmatprep.subr.mxu0 %v387
        %640 = vmatpush1.msra.mxu0 %v386
        %641 = vmatprep.subr.mxu0 %v395
        %642 = vmatpush1.msra.mxu0 %v394
        %643 = vmatprep.subr.mxu0 %v403
        %644 = vmatpush1.msra.mxu0 %v402
        %645 = vmatprep.subr.mxu0 %v411
        %646 = vmatpush1.msra.mxu0 %v410
        %647 = vmatprep.subr.mxu0 %v419
        %648 = vmatpush1.msra.mxu0 %v418
        %649 = vmatprep.subr.mxu0 %v427
        %650 = vmatpush1.msra.mxu0 %v426
        %651 = vmatprep.subr.mxu0 %v435
        %652 = vmatpush1.msra.mxu0 %v434
        %653 = vmatprep.subr.mxu0 %v443
        %654 = vmatpush1.msra.mxu0 %v442
        %655 = vmatprep.subr.mxu0 %v451
        %656 = vmatpush1.msra.mxu0 %v450
        %657 = vmatprep.subr.mxu0 %v459
        %658 = vmatpush1.msra.mxu0 %v458
        %659 = vmatprep.subr.mxu0 %v467
        %660 = vmatpush1.msra.mxu0 %v466
        %661 = vmatprep.subr.mxu0 %v475
        %662 = vmatpush1.msra.mxu0 %v474
        %663 = vmatprep.subr.mxu0 %v483
        %664 = vmatpush1.msra.mxu0 %v482
        %665 = vmatprep.subr.mxu0 %v491
        %666 = vmatpush1.msra.mxu0 %v490
        %667 = vmatprep.subr.mxu0 %v499
        %668 = vmatpush1.msra.mxu0 %v498
        %669 = vmatprep.subr.mxu0 %v507
        %670 = vmatpush1.msra.mxu0 %v506
        %671 = vmatprep.subr.mxu0 %v515
        %672 = vmatpush1.msra.mxu0 %v514
        %673 = vmatprep.subr.mxu0 %v523
        %674 = vmatpush1.msra.mxu0 %v522
        %675 = vmatprep.subr.mxu0 %v531
        %676 = vmatpush1.msra.mxu0 %v530
        %677 = vmatprep.subr.mxu0 %v539
        %678 = vmatpush1.msra.mxu0 %v538
        %679 = vmatprep.subr.mxu0 %v547
        %680 = vmatpush1.msra.mxu0 %v546
        %681 = vmatprep.subr.mxu0 %v555
        %682 = vmatpush1.msra.mxu0 %v554
        %683 = vmatprep.subr.mxu0 %v563
        %684 = vmatpush1.msra.mxu0 %v562
        %685 = vmatprep.subr.mxu0 %v571
        %686 = vmatpush1.msra.mxu0 %v570
        %687 = vmatprep.subr.mxu0 %v579
        %688 = vmatpush1.msra.mxu0 %v578
        %689 = vmatprep.subr.mxu0 %v587
        %690 = vmatpush1.msra.mxu0 %v586
        %691 = vmatprep.subr.mxu0 %v595
        %692 = vmatpush1.msra.mxu0 %v594
        %693 = vmatprep.subr.mxu0 %v603
        %694 = vmatpush1.msra.mxu0 %v602
        %695 = vmatprep.subr.mxu0 %v611
        %696 = vmatpush1.msra.mxu0 %v610
        %697 = vmatprep.subr.mxu0 %v619
        %698 = vmatpush1.msra.mxu0 %v618
        %699 = vmatprep.subr.mxu0 %v627
        %700 = vmatpush1.msra.mxu0 %v626
        %701 = vmatprep.mubr.f32.mxu0 %v635
        %702 = vmatmul.mubr.f32.gmra.mrb[0].mxu0 %v361
        %v703 = vpop.f32.mrb[0].mxu0
        %v704 = vadd.f32 0.0, %v703
        %v705 = vpop.f32.mrb[0].mxu0
        %v706 = vadd.f32 0.0, %v705
        %707 = vdwg.mxu0
        %708 = vmatprep.subr.mxu0 %v381
        %709 = vmatpush1.msra.mxu0 %v380
        %710 = vmatprep.subr.mxu0 %v389
        %711 = vmatpush1.msra.mxu0 %v388
        %712 = vmatprep.subr.mxu0 %v397
        %713 = vmatpush1.msra.mxu0 %v396
        %714 = vmatprep.subr.mxu0 %v405
        %715 = vmatpush1.msra.mxu0 %v404
        %716 = vmatprep.subr.mxu0 %v413
        %717 = vmatpush1.msra.mxu0 %v412
        %718 = vmatprep.subr.mxu0 %v421
        %719 = vmatpush1.msra.mxu0 %v420
        %720 = vmatprep.subr.mxu0 %v429
        %721 = vmatpush1.msra.mxu0 %v428
        %722 = vmatprep.subr.mxu0 %v437
        %723 = vmatpush1.msra.mxu0 %v436
        %724 = vmatprep.subr.mxu0 %v445
        %725 = vmatpush1.msra.mxu0 %v444
        %726 = vmatprep.subr.mxu0 %v453
        %727 = vmatpush1.msra.mxu0 %v452
        %728 = vmatprep.subr.mxu0 %v461
        %729 = vmatpush1.msra.mxu0 %v460
        %730 = vmatprep.subr.mxu0 %v469
        %731 = vmatpush1.msra.mxu0 %v468
        %732 = vmatprep.subr.mxu0 %v477
        %733 = vmatpush1.msra.mxu0 %v476
        %734 = vmatprep.subr.mxu0 %v485
        %735 = vmatpush1.msra.mxu0 %v484
        %736 = vmatprep.subr.mxu0 %v493
        %737 = vmatpush1.msra.mxu0 %v492
        %738 = vmatprep.subr.mxu0 %v501
        %739 = vmatpush1.msra.mxu0 %v500
        %740 = vmatprep.subr.mxu0 %v509
        %741 = vmatpush1.msra.mxu0 %v508
        %742 = vmatprep.subr.mxu0 %v517
        %743 = vmatpush1.msra.mxu0 %v516
        %744 = vmatprep.subr.mxu0 %v525
        %745 = vmatpush1.msra.mxu0 %v524
        %746 = vmatprep.subr.mxu0 %v533
        %747 = vmatpush1.msra.mxu0 %v532
        %748 = vmatprep.subr.mxu0 %v541
        %749 = vmatpush1.msra.mxu0 %v540
        %750 = vmatprep.subr.mxu0 %v549
        %751 = vmatpush1.msra.mxu0 %v548
        %752 = vmatprep.subr.mxu0 %v557
        %753 = vmatpush1.msra.mxu0 %v556
        %754 = vmatprep.subr.mxu0 %v565
        %755 = vmatpush1.msra.mxu0 %v564
        %756 = vmatprep.subr.mxu0 %v573
        %757 = vmatpush1.msra.mxu0 %v572
        %758 = vmatprep.subr.mxu0 %v581
        %759 = vmatpush1.msra.mxu0 %v580
        %760 = vmatprep.subr.mxu0 %v589
        %761 = vmatpush1.msra.mxu0 %v588
        %762 = vmatprep.subr.mxu0 %v597
        %763 = vmatpush1.msra.mxu0 %v596
        %764 = vmatprep.subr.mxu0 %v605
        %765 = vmatpush1.msra.mxu0 %v604
        %766 = vmatprep.subr.mxu0 %v613
        %767 = vmatpush1.msra.mxu0 %v612
        %768 = vmatprep.subr.mxu0 %v621
        %769 = vmatpush1.msra.mxu0 %v620
        %770 = vmatprep.subr.mxu0 %v629
        %771 = vmatpush1.msra.mxu0 %v628
        %772 = vmatprep.mubr.f32.mxu0 %v635
        %773 = vmatmul.mubr.f32.gmra.mrb[0].mxu0 %v361
        %v774 = vpop.f32.mrb[0].mxu0
        %v775 = vadd.f32 0.0, %v774
        %v776 = vpop.f32.mrb[0].mxu0
        %v777 = vadd.f32 0.0, %v776
        %778 = vdwg.mxu0
        %779 = vmatprep.subr.mxu0 %v383
        %780 = vmatpush1.msra.mxu0 %v382
        %781 = vmatprep.subr.mxu0 %v391
        %782 = vmatpush1.msra.mxu0 %v390
        %783 = vmatprep.subr.mxu0 %v399
        %784 = vmatpush1.msra.mxu0 %v398
        %785 = vmatprep.subr.mxu0 %v407
        %786 = vmatpush1.msra.mxu0 %v406
        %787 = vmatprep.subr.mxu0 %v415
        %788 = vmatpush1.msra.mxu0 %v414
        %789 = vmatprep.subr.mxu0 %v423
        %790 = vmatpush1.msra.mxu0 %v422
        %791 = vmatprep.subr.mxu0 %v431
        %792 = vmatpush1.msra.mxu0 %v430
        %793 = vmatprep.subr.mxu0 %v439
        %794 = vmatpush1.msra.mxu0 %v438
        %795 = vmatprep.subr.mxu0 %v447
        %796 = vmatpush1.msra.mxu0 %v446
        %797 = vmatprep.subr.mxu0 %v455
        %798 = vmatpush1.msra.mxu0 %v454
        %799 = vmatprep.subr.mxu0 %v463
        %800 = vmatpush1.msra.mxu0 %v462
        %801 = vmatprep.subr.mxu0 %v471
        %802 = vmatpush1.msra.mxu0 %v470
        %803 = vmatprep.subr.mxu0 %v479
        %804 = vmatpush1.msra.mxu0 %v478
        %805 = vmatprep.subr.mxu0 %v487
        %806 = vmatpush1.msra.mxu0 %v486
        %807 = vmatprep.subr.mxu0 %v495
        %808 = vmatpush1.msra.mxu0 %v494
        %809 = vmatprep.subr.mxu0 %v503
        %810 = vmatpush1.msra.mxu0 %v502
        %811 = vmatprep.subr.mxu0 %v511
        %812 = vmatpush1.msra.mxu0 %v510
        %813 = vmatprep.subr.mxu0 %v519
        %814 = vmatpush1.msra.mxu0 %v518
        %815 = vmatprep.subr.mxu0 %v527
        %816 = vmatpush1.msra.mxu0 %v526
        %817 = vmatprep.subr.mxu0 %v535
        %818 = vmatpush1.msra.mxu0 %v534
        %819 = vmatprep.subr.mxu0 %v543
        %820 = vmatpush1.msra.mxu0 %v542
        %821 = vmatprep.subr.mxu0 %v551
        %822 = vmatpush1.msra.mxu0 %v550
        %823 = vmatprep.subr.mxu0 %v559
        %824 = vmatpush1.msra.mxu0 %v558
        %825 = vmatprep.subr.mxu0 %v567
        %826 = vmatpush1.msra.mxu0 %v566
        %827 = vmatprep.subr.mxu0 %v575
        %828 = vmatpush1.msra.mxu0 %v574
        %829 = vmatprep.subr.mxu0 %v583
        %830 = vmatpush1.msra.mxu0 %v582
        %831 = vmatprep.subr.mxu0 %v591
        %832 = vmatpush1.msra.mxu0 %v590
        %833 = vmatprep.subr.mxu0 %v599
        %834 = vmatpush1.msra.mxu0 %v598
        %835 = vmatprep.subr.mxu0 %v607
        %836 = vmatpush1.msra.mxu0 %v606
        %837 = vmatprep.subr.mxu0 %v615
        %838 = vmatpush1.msra.mxu0 %v614
        %839 = vmatprep.subr.mxu0 %v623
        %840 = vmatpush1.msra.mxu0 %v622
        %841 = vmatprep.subr.mxu0 %v631
        %842 = vmatpush1.msra.mxu0 %v630
        %843 = vmatprep.mubr.f32.mxu0 %v635
        %844 = vmatmul.mubr.f32.gmra.mrb[0].mxu0 %v361
        %v845 = vpop.f32.mrb[0].mxu0
        %v846 = vadd.f32 0.0, %v845
        %v847 = vpop.f32.mrb[0].mxu0
        %v848 = vadd.f32 0.0, %v847
        %849 = vdwg.mxu0
        %850 = vmatprep.subr.mxu0 %v385
        %851 = vmatpush1.msra.mxu0 %v384
        %852 = vmatprep.subr.mxu0 %v393
        %853 = vmatpush1.msra.mxu0 %v392
        %854 = vmatprep.subr.mxu0 %v401
        %855 = vmatpush1.msra.mxu0 %v400
        %856 = vmatprep.subr.mxu0 %v409
        %857 = vmatpush1.msra.mxu0 %v408
        %858 = vmatprep.subr.mxu0 %v417
        %859 = vmatpush1.msra.mxu0 %v416
        %860 = vmatprep.subr.mxu0 %v425
        %861 = vmatpush1.msra.mxu0 %v424
        %862 = vmatprep.subr.mxu0 %v433
        %863 = vmatpush1.msra.mxu0 %v432
        %864 = vmatprep.subr.mxu0 %v441
        %865 = vmatpush1.msra.mxu0 %v440
        %866 = vmatprep.subr.mxu0 %v449
        %867 = vmatpush1.msra.mxu0 %v448
        %868 = vmatprep.subr.mxu0 %v457
        %869 = vmatpush1.msra.mxu0 %v456
        %870 = vmatprep.subr.mxu0 %v465
        %871 = vmatpush1.msra.mxu0 %v464
        %872 = vmatprep.subr.mxu0 %v473
        %873 = vmatpush1.msra.mxu0 %v472
        %874 = vmatprep.subr.mxu0 %v481
        %875 = vmatpush1.msra.mxu0 %v480
        %876 = vmatprep.subr.mxu0 %v489
        %877 = vmatpush1.msra.mxu0 %v488
        %878 = vmatprep.subr.mxu0 %v497
        %879 = vmatpush1.msra.mxu0 %v496
        %880 = vmatprep.subr.mxu0 %v505
        %881 = vmatpush1.msra.mxu0 %v504
        %882 = vmatprep.subr.mxu0 %v513
        %883 = vmatpush1.msra.mxu0 %v512
        %884 = vmatprep.subr.mxu0 %v521
        %885 = vmatpush1.msra.mxu0 %v520
        %886 = vmatprep.subr.mxu0 %v529
        %887 = vmatpush1.msra.mxu0 %v528
        %888 = vmatprep.subr.mxu0 %v537
        %889 = vmatpush1.msra.mxu0 %v536
        %890 = vmatprep.subr.mxu0 %v545
        %891 = vmatpush1.msra.mxu0 %v544
        %892 = vmatprep.subr.mxu0 %v553
        %893 = vmatpush1.msra.mxu0 %v552
        %894 = vmatprep.subr.mxu0 %v561
        %895 = vmatpush1.msra.mxu0 %v560
        %896 = vmatprep.subr.mxu0 %v569
        %897 = vmatpush1.msra.mxu0 %v568
        %898 = vmatprep.subr.mxu0 %v577
        %899 = vmatpush1.msra.mxu0 %v576
        %900 = vmatprep.subr.mxu0 %v585
        %901 = vmatpush1.msra.mxu0 %v584
        %902 = vmatprep.subr.mxu0 %v593
        %903 = vmatpush1.msra.mxu0 %v592
        %904 = vmatprep.subr.mxu0 %v601
        %905 = vmatpush1.msra.mxu0 %v600
        %906 = vmatprep.subr.mxu0 %v609
        %907 = vmatpush1.msra.mxu0 %v608
        %908 = vmatprep.subr.mxu0 %v617
        %909 = vmatpush1.msra.mxu0 %v616
        %910 = vmatprep.subr.mxu0 %v625
        %911 = vmatpush1.msra.mxu0 %v624
        %912 = vmatprep.subr.mxu0 %v633
        %913 = vmatpush1.msra.mxu0 %v632
        %914 = vmatprep.mubr.f32.mxu0 %v635
        %915 = vmatmul.mubr.f32.gmra.mrb[0].mxu0 %v361
        %v916 = vpop.f32.mrb[0].mxu0
        %v917 = vadd.f32 0.0, %v916
        %v918 = vpop.f32.mrb[0].mxu0
        %v919 = vadd.f32 0.0, %v918
        %920 = vdwg.mxu0
        %922 = vrot.lane.b32.xlu0 %v919, 33
        %v923 = vpop.permute.xlu0 %922
        %932 = vrot.lane.b32.xlu0 %v704, 33
        %v933 = vpop.permute.xlu0 %932
        %934 = vrot.lane.b32.xlu0 %v706, 33
        %v935 = vpop.permute.xlu0 %934
        %936 = vrot.lane.b32.xlu0 %v775, 33
        %v937 = vpop.permute.xlu0 %936
        %938 = vrot.lane.b32.xlu0 %v777, 33
        %v939 = vpop.permute.xlu0 %938
        %940 = vrot.lane.b32.xlu0 %v846, 33
        %v941 = vpop.permute.xlu0 %940
        %942 = vrot.lane.b32.xlu0 %v848, 33
        %v943 = vpop.permute.xlu0 %942
        %944 = vrot.lane.b32.xlu0 %v917, 33
        %v945 = vpop.permute.xlu0 %944
        %vm946 = vcmask 269312
        %v947 = vsel %vm946, %v933, %v935
        %v948 = vsel %vm946, %v935, %v937
        %v949 = vsel %vm946, %v937, %v939
        %v950 = vsel %vm946, %v939, %v941
        %v951 = vsel %vm946, %v941, %v943
        %v952 = vsel %vm946, %v943, %v945
        %v953 = vsel %vm946, %v945, %v923
        %v962 = vsel %vm946, %v923, %v933
        %v963 = vlaneseq
        %v964 = vshrl.u32 %v963, 7
        %v965 = vsub.s32 0, %v964
        %v966 = vrot.slane %v362, %v965
        %v967 = vlaneseq
        %v968 = vshrl.u32 %v967, 7
        %v969 = vsub.s32 0, %v968
        %v970 = vrot.slane %v363, %v969
        %v971 = vlaneseq
        %v972 = vshrl.u32 %v971, 7
        %v973 = vsub.s32 0, %v972
        %v974 = vrot.slane %v364, %v973
        %v975 = vlaneseq
        %v976 = vshrl.u32 %v975, 7
        %v977 = vsub.s32 0, %v976
        %v978 = vrot.slane %v365, %v977
        %v979 = vlaneseq
        %v980 = vshrl.u32 %v979, 7
        %v981 = vsub.s32 0, %v980
        %v982 = vrot.slane %v366, %v981
        %v983 = vlaneseq
        %v984 = vshrl.u32 %v983, 7
        %v985 = vsub.s32 0, %v984
        %v986 = vrot.slane %v367, %v985
        %v987 = vlaneseq
        %v988 = vshrl.u32 %v987, 7
        %v989 = vsub.s32 0, %v988
        %v990 = vrot.slane %v368, %v989
        %v991 = vlaneseq
        %v992 = vshrl.u32 %v991, 7
        %v993 = vsub.s32 0, %v992
        %v994 = vrot.slane %v369, %v993
        %v995 = vmul.f32 %v962, %v966
        %v996 = vmul.f32 %v947, %v970
        %v997 = vmul.f32 %v948, %v974
        %v998 = vmul.f32 %v949, %v978
        %v999 = vmul.f32 %v950, %v982
        %v1000 = vmul.f32 %v951, %v986
        %v1001 = vmul.f32 %v952, %v990
        %v1002 = vmul.f32 %v953, %v994
        %1003 = vrot.lane.b32.xlu0 %v919, 32
        %v1004 = vpop.permute.xlu0 %1003
        %1006 = vrot.lane.b32.xlu0 %v704, 32
        %v1007 = vpop.permute.xlu0 %1006
        %1008 = vrot.lane.b32.xlu0 %v706, 32
        %v1009 = vpop.permute.xlu0 %1008
        %1010 = vrot.lane.b32.xlu0 %v775, 32
        %v1011 = vpop.permute.xlu0 %1010
        %1012 = vrot.lane.b32.xlu0 %v777, 32
        %v1013 = vpop.permute.xlu0 %1012
        %1014 = vrot.lane.b32.xlu0 %v846, 32
        %v1015 = vpop.permute.xlu0 %1014
        %1016 = vrot.lane.b32.xlu0 %v848, 32
        %v1017 = vpop.permute.xlu0 %1016
        %1018 = vrot.lane.b32.xlu0 %v917, 32
        %v1019 = vpop.permute.xlu0 %1018
        %vm1020 = vcmask 261120
        %v1021 = vsel %vm1020, %v1007, %v1009
        %v1022 = vsel %vm1020, %v1009, %v1011
        %v1023 = vsel %vm1020, %v1011, %v1013
        %v1024 = vsel %vm1020, %v1013, %v1015
        %v1025 = vsel %vm1020, %v1015, %v1017
        %v1026 = vsel %vm1020, %v1017, %v1019
        %v1027 = vsel %vm1020, %v1019, %v1004
        %v1036 = vsel %vm1020, %v1004, %v1007
        %v1037 = vlaneseq
        %v1038 = vshrl.u32 %v1037, 7
        %v1039 = vsub.s32 1, %v1038
        %v1040 = vrot.slane %v362, %v1039
        %v1041 = vlaneseq
        %v1042 = vshrl.u32 %v1041, 7
        %v1043 = vsub.s32 1, %v1042
        %v1044 = vrot.slane %v363, %v1043
        %v1045 = vlaneseq
        %v1046 = vshrl.u32 %v1045, 7
        %v1047 = vsub.s32 1, %v1046
        %v1048 = vrot.slane %v364, %v1047
        %v1049 = vlaneseq
        %v1050 = vshrl.u32 %v1049, 7
        %v1051 = vsub.s32 1, %v1050
        %v1052 = vrot.slane %v365, %v1051
        %v1053 = vlaneseq
        %v1054 = vshrl.u32 %v1053, 7
        %v1055 = vsub.s32 1, %v1054
        %v1056 = vrot.slane %v366, %v1055
        %v1057 = vlaneseq
        %v1058 = vshrl.u32 %v1057, 7
        %v1059 = vsub.s32 1, %v1058
        %v1060 = vrot.slane %v367, %v1059
        %v1061 = vlaneseq
        %v1062 = vshrl.u32 %v1061, 7
        %v1063 = vsub.s32 1, %v1062
        %v1064 = vrot.slane %v368, %v1063
        %v1065 = vlaneseq
        %v1066 = vshrl.u32 %v1065, 7
        %v1067 = vsub.s32 1, %v1066
        %v1068 = vrot.slane %v369, %v1067
        %v1069 = vmul.f32 %v1036, %v1040
        %v1070 = vmul.f32 %v1021, %v1044
        %v1071 = vmul.f32 %v1022, %v1048
        %v1072 = vmul.f32 %v1023, %v1052
        %v1073 = vmul.f32 %v1024, %v1056
        %v1074 = vmul.f32 %v1025, %v1060
        %v1075 = vmul.f32 %v1026, %v1064
        %v1076 = vmul.f32 %v1027, %v1068
        %1077 = vrot.lane.b32.xlu0 %v919, 31
        %v1078 = vpop.permute.xlu0 %1077
        %1080 = vrot.lane.b32.xlu0 %v704, 31
        %v1081 = vpop.permute.xlu0 %1080
        %1082 = vrot.lane.b32.xlu0 %v706, 31
        %v1083 = vpop.permute.xlu0 %1082
        %1084 = vrot.lane.b32.xlu0 %v775, 31
        %v1085 = vpop.permute.xlu0 %1084
        %1086 = vrot.lane.b32.xlu0 %v777, 31
        %v1087 = vpop.permute.xlu0 %1086
        %1088 = vrot.lane.b32.xlu0 %v846, 31
        %v1089 = vpop.permute.xlu0 %1088
        %1090 = vrot.lane.b32.xlu0 %v848, 31
        %v1091 = vpop.permute.xlu0 %1090
        %1092 = vrot.lane.b32.xlu0 %v917, 31
        %v1093 = vpop.permute.xlu0 %1092
        %vm1094 = vcmask 252928
        %v1095 = vsel %vm1094, %v1081, %v1083
        %v1096 = vsel %vm1094, %v1083, %v1085
        %v1097 = vsel %vm1094, %v1085, %v1087
        %v1098 = vsel %vm1094, %v1087, %v1089
        %v1099 = vsel %vm1094, %v1089, %v1091
        %v1100 = vsel %vm1094, %v1091, %v1093
        %v1101 = vsel %vm1094, %v1093, %v1078
        %v1110 = vsel %vm1094, %v1078, %v1081
        %v1111 = vlaneseq
        %v1112 = vshrl.u32 %v1111, 7
        %v1113 = vsub.s32 2, %v1112
        %v1114 = vrot.slane %v362, %v1113
        %v1115 = vlaneseq
        %v1116 = vshrl.u32 %v1115, 7
        %v1117 = vsub.s32 2, %v1116
        %v1118 = vrot.slane %v363, %v1117
        %v1119 = vlaneseq
        %v1120 = vshrl.u32 %v1119, 7
        %v1121 = vsub.s32 2, %v1120
        %v1122 = vrot.slane %v364, %v1121
        %v1123 = vlaneseq
        %v1124 = vshrl.u32 %v1123, 7
        %v1125 = vsub.s32 2, %v1124
        %v1126 = vrot.slane %v365, %v1125
        %v1127 = vlaneseq
        %v1128 = vshrl.u32 %v1127, 7
        %v1129 = vsub.s32 2, %v1128
        %v1130 = vrot.slane %v366, %v1129
        %v1131 = vlaneseq
        %v1132 = vshrl.u32 %v1131, 7
        %v1133 = vsub.s32 2, %v1132
        %v1134 = vrot.slane %v367, %v1133
        %v1135 = vlaneseq
        %v1136 = vshrl.u32 %v1135, 7
        %v1137 = vsub.s32 2, %v1136
        %v1138 = vrot.slane %v368, %v1137
        %v1139 = vlaneseq
        %v1140 = vshrl.u32 %v1139, 7
        %v1141 = vsub.s32 2, %v1140
        %v1142 = vrot.slane %v369, %v1141
        %v1143 = vmul.f32 %v1110, %v1114
        %v1144 = vmul.f32 %v1095, %v1118
        %v1145 = vmul.f32 %v1096, %v1122
        %v1146 = vmul.f32 %v1097, %v1126
        %v1147 = vmul.f32 %v1098, %v1130
        %v1148 = vmul.f32 %v1099, %v1134
        %v1149 = vmul.f32 %v1100, %v1138
        %v1150 = vmul.f32 %v1101, %v1142
        %1151 = vrot.lane.b32.xlu0 %v919, 1
        %v1152 = vpop.permute.xlu0 %1151
        %1154 = vrot.lane.b32.xlu0 %v704, 1
        %v1155 = vpop.permute.xlu0 %1154
        %1156 = vrot.lane.b32.xlu0 %v706, 1
        %v1157 = vpop.permute.xlu0 %1156
        %1158 = vrot.lane.b32.xlu0 %v775, 1
        %v1159 = vpop.permute.xlu0 %1158
        %1160 = vrot.lane.b32.xlu0 %v777, 1
        %v1161 = vpop.permute.xlu0 %1160
        %1162 = vrot.lane.b32.xlu0 %v846, 1
        %v1163 = vpop.permute.xlu0 %1162
        %1164 = vrot.lane.b32.xlu0 %v848, 1
        %v1165 = vpop.permute.xlu0 %1164
        %1166 = vrot.lane.b32.xlu0 %v917, 1
        %v1167 = vpop.permute.xlu0 %1166
        %vm1168 = vcmask 7168
        %v1169 = vsel %vm1168, %v1155, %v1157
        %v1170 = vsel %vm1168, %v1157, %v1159
        %v1171 = vsel %vm1168, %v1159, %v1161
        %v1172 = vsel %vm1168, %v1161, %v1163
        %v1173 = vsel %vm1168, %v1163, %v1165
        %v1174 = vsel %vm1168, %v1165, %v1167
        %v1175 = vsel %vm1168, %v1167, %v1152
        %v1184 = vsel %vm1168, %v1152, %v1155
        %v1185 = vlaneseq
        %v1186 = vshrl.u32 %v1185, 7
        %v1187 = vsub.s32 3, %v1186
        %v1188 = vrot.slane %v362, %v1187
        %v1189 = vlaneseq
        %v1190 = vshrl.u32 %v1189, 7
        %v1191 = vsub.s32 3, %v1190
        %v1192 = vrot.slane %v363, %v1191
        %v1193 = vlaneseq
        %v1194 = vshrl.u32 %v1193, 7
        %v1195 = vsub.s32 3, %v1194
        %v1196 = vrot.slane %v364, %v1195
        %v1197 = vlaneseq
        %v1198 = vshrl.u32 %v1197, 7
        %v1199 = vsub.s32 3, %v1198
        %v1200 = vrot.slane %v365, %v1199
        %v1201 = vlaneseq
        %v1202 = vshrl.u32 %v1201, 7
        %v1203 = vsub.s32 3, %v1202
        %v1204 = vrot.slane %v366, %v1203
        %v1205 = vlaneseq
        %v1206 = vshrl.u32 %v1205, 7
        %v1207 = vsub.s32 3, %v1206
        %v1208 = vrot.slane %v367, %v1207
        %v1209 = vlaneseq
        %v1210 = vshrl.u32 %v1209, 7
        %v1211 = vsub.s32 3, %v1210
        %v1212 = vrot.slane %v368, %v1211
        %v1213 = vlaneseq
        %v1214 = vshrl.u32 %v1213, 7
        %v1215 = vsub.s32 3, %v1214
        %v1216 = vrot.slane %v369, %v1215
        %v1217 = vmul.f32 %v1184, %v1188
        %v1218 = vmul.f32 %v1169, %v1192
        %v1219 = vmul.f32 %v1170, %v1196
        %v1220 = vmul.f32 %v1171, %v1200
        %v1221 = vmul.f32 %v1172, %v1204
        %v1222 = vmul.f32 %v1173, %v1208
        %v1223 = vmul.f32 %v1174, %v1212
        %v1224 = vmul.f32 %v1175, %v1216
        %1225 = vrot.lane.b32.xlu0 %v704, 127
        %v1226 = vpop.permute.xlu0 %1225
        %1227 = vrot.lane.b32.xlu0 %v706, 127
        %v1228 = vpop.permute.xlu0 %1227
        %1229 = vrot.lane.b32.xlu0 %v775, 127
        %v1230 = vpop.permute.xlu0 %1229
        %1231 = vrot.lane.b32.xlu0 %v777, 127
        %v1232 = vpop.permute.xlu0 %1231
        %1233 = vrot.lane.b32.xlu0 %v846, 127
        %v1234 = vpop.permute.xlu0 %1233
        %1235 = vrot.lane.b32.xlu0 %v848, 127
        %v1236 = vpop.permute.xlu0 %1235
        %1237 = vrot.lane.b32.xlu0 %v917, 127
        %v1238 = vpop.permute.xlu0 %1237
        %1239 = vrot.lane.b32.xlu0 %v919, 127
        %v1240 = vpop.permute.xlu0 %1239
        %vm1241 = vcmask 1039360
        %v1242 = vsel %vm1241, %v1226, %v1228
        %v1243 = vsel %vm1241, %v1228, %v1230
        %v1244 = vsel %vm1241, %v1230, %v1232
        %v1245 = vsel %vm1241, %v1232, %v1234
        %v1246 = vsel %vm1241, %v1234, %v1236
        %v1247 = vsel %vm1241, %v1236, %v1238
        %v1248 = vsel %vm1241, %v1238, %v1240
        %v1258 = vsel %vm1241, %v1240, %v1226
        %v1259 = vlaneseq
        %v1260 = vshrl.u32 %v1259, 7
        %v1261 = vsub.s32 5, %v1260
        %v1262 = vrot.slane %v362, %v1261
        %v1263 = vlaneseq
        %v1264 = vshrl.u32 %v1263, 7
        %v1265 = vsub.s32 5, %v1264
        %v1266 = vrot.slane %v363, %v1265
        %v1267 = vlaneseq
        %v1268 = vshrl.u32 %v1267, 7
        %v1269 = vsub.s32 5, %v1268
        %v1270 = vrot.slane %v364, %v1269
        %v1271 = vlaneseq
        %v1272 = vshrl.u32 %v1271, 7
        %v1273 = vsub.s32 5, %v1272
        %v1274 = vrot.slane %v365, %v1273
        %v1275 = vlaneseq
        %v1276 = vshrl.u32 %v1275, 7
        %v1277 = vsub.s32 5, %v1276
        %v1278 = vrot.slane %v366, %v1277
        %v1279 = vlaneseq
        %v1280 = vshrl.u32 %v1279, 7
        %v1281 = vsub.s32 5, %v1280
        %v1282 = vrot.slane %v367, %v1281
        %v1283 = vlaneseq
        %v1284 = vshrl.u32 %v1283, 7
        %v1285 = vsub.s32 5, %v1284
        %v1286 = vrot.slane %v368, %v1285
        %v1287 = vlaneseq
        %v1288 = vshrl.u32 %v1287, 7
        %v1289 = vsub.s32 5, %v1288
        %v1290 = vrot.slane %v369, %v1289
        %v1291 = vmul.f32 %v1242, %v1262
        %v1292 = vmul.f32 %v1243, %v1266
        %v1293 = vmul.f32 %v1244, %v1270
        %v1294 = vmul.f32 %v1245, %v1274
        %v1295 = vmul.f32 %v1246, %v1278
        %v1296 = vmul.f32 %v1247, %v1282
        %v1297 = vmul.f32 %v1248, %v1286
        %v1298 = vmul.f32 %v1258, %v1290
        %1299 = vrot.lane.b32.xlu0 %v704, 97
        %v1300 = vpop.permute.xlu0 %1299
        %1301 = vrot.lane.b32.xlu0 %v706, 97
        %v1302 = vpop.permute.xlu0 %1301
        %1303 = vrot.lane.b32.xlu0 %v775, 97
        %v1304 = vpop.permute.xlu0 %1303
        %1305 = vrot.lane.b32.xlu0 %v777, 97
        %v1306 = vpop.permute.xlu0 %1305
        %1307 = vrot.lane.b32.xlu0 %v846, 97
        %v1308 = vpop.permute.xlu0 %1307
        %1309 = vrot.lane.b32.xlu0 %v848, 97
        %v1310 = vpop.permute.xlu0 %1309
        %1311 = vrot.lane.b32.xlu0 %v917, 97
        %v1312 = vpop.permute.xlu0 %1311
        %1313 = vrot.lane.b32.xlu0 %v919, 97
        %v1314 = vpop.permute.xlu0 %1313
        %vm1315 = vcmask 793600
        %v1316 = vsel %vm1315, %v1300, %v1302
        %v1317 = vsel %vm1315, %v1302, %v1304
        %v1318 = vsel %vm1315, %v1304, %v1306
        %v1319 = vsel %vm1315, %v1306, %v1308
        %v1320 = vsel %vm1315, %v1308, %v1310
        %v1321 = vsel %vm1315, %v1310, %v1312
        %v1322 = vsel %vm1315, %v1312, %v1314
        %v1332 = vsel %vm1315, %v1314, %v1300
        %v1333 = vlaneseq
        %v1334 = vshrl.u32 %v1333, 7
        %v1335 = vsub.s32 6, %v1334
        %v1336 = vrot.slane %v362, %v1335
        %v1337 = vlaneseq
        %v1338 = vshrl.u32 %v1337, 7
        %v1339 = vsub.s32 6, %v1338
        %v1340 = vrot.slane %v363, %v1339
        %v1341 = vlaneseq
        %v1342 = vshrl.u32 %v1341, 7
        %v1343 = vsub.s32 6, %v1342
        %v1344 = vrot.slane %v364, %v1343
        %v1345 = vlaneseq
        %v1346 = vshrl.u32 %v1345, 7
        %v1347 = vsub.s32 6, %v1346
        %v1348 = vrot.slane %v365, %v1347
        %v1349 = vlaneseq
        %v1350 = vshrl.u32 %v1349, 7
        %v1351 = vsub.s32 6, %v1350
        %v1352 = vrot.slane %v366, %v1351
        %v1353 = vlaneseq
        %v1354 = vshrl.u32 %v1353, 7
        %v1355 = vsub.s32 6, %v1354
        %v1356 = vrot.slane %v367, %v1355
        %v1357 = vlaneseq
        %v1358 = vshrl.u32 %v1357, 7
        %v1359 = vsub.s32 6, %v1358
        %v1360 = vrot.slane %v368, %v1359
        %v1361 = vlaneseq
        %v1362 = vshrl.u32 %v1361, 7
        %v1363 = vsub.s32 6, %v1362
        %v1364 = vrot.slane %v369, %v1363
        %v1365 = vmul.f32 %v1316, %v1336
        %v1366 = vmul.f32 %v1317, %v1340
        %v1367 = vmul.f32 %v1318, %v1344
        %v1368 = vmul.f32 %v1319, %v1348
        %v1369 = vmul.f32 %v1320, %v1352
        %v1370 = vmul.f32 %v1321, %v1356
        %v1371 = vmul.f32 %v1322, %v1360
        %v1372 = vmul.f32 %v1332, %v1364
        %1373 = vrot.lane.b32.xlu0 %v704, 96
        %v1374 = vpop.permute.xlu0 %1373
        %1375 = vrot.lane.b32.xlu0 %v706, 96
        %v1376 = vpop.permute.xlu0 %1375
        %1377 = vrot.lane.b32.xlu0 %v775, 96
        %v1378 = vpop.permute.xlu0 %1377
        %1379 = vrot.lane.b32.xlu0 %v777, 96
        %v1380 = vpop.permute.xlu0 %1379
        %1381 = vrot.lane.b32.xlu0 %v846, 96
        %v1382 = vpop.permute.xlu0 %1381
        %1383 = vrot.lane.b32.xlu0 %v848, 96
        %v1384 = vpop.permute.xlu0 %1383
        %1385 = vrot.lane.b32.xlu0 %v917, 96
        %v1386 = vpop.permute.xlu0 %1385
        %1387 = vrot.lane.b32.xlu0 %v919, 96
        %v1388 = vpop.permute.xlu0 %1387
        %vm1389 = vcmask 785408
        %v1390 = vsel %vm1389, %v1374, %v1376
        %v1391 = vsel %vm1389, %v1376, %v1378
        %v1392 = vsel %vm1389, %v1378, %v1380
        %v1393 = vsel %vm1389, %v1380, %v1382
        %v1394 = vsel %vm1389, %v1382, %v1384
        %v1395 = vsel %vm1389, %v1384, %v1386
        %v1396 = vsel %vm1389, %v1386, %v1388
        %v1406 = vsel %vm1389, %v1388, %v1374
        %v1407 = vlaneseq
        %v1408 = vshrl.u32 %v1407, 7
        %v1409 = vsub.s32 7, %v1408
        %v1410 = vrot.slane %v362, %v1409
        %v1411 = vlaneseq
        %v1412 = vshrl.u32 %v1411, 7
        %v1413 = vsub.s32 7, %v1412
        %v1414 = vrot.slane %v363, %v1413
        %v1415 = vlaneseq
        %v1416 = vshrl.u32 %v1415, 7
        %v1417 = vsub.s32 7, %v1416
        %v1418 = vrot.slane %v364, %v1417
        %v1419 = vlaneseq
        %v1420 = vshrl.u32 %v1419, 7
        %v1421 = vsub.s32 7, %v1420
        %v1422 = vrot.slane %v365, %v1421
        %v1423 = vlaneseq
        %v1424 = vshrl.u32 %v1423, 7
        %v1425 = vsub.s32 7, %v1424
        %v1426 = vrot.slane %v366, %v1425
        %v1427 = vlaneseq
        %v1428 = vshrl.u32 %v1427, 7
        %v1429 = vsub.s32 7, %v1428
        %v1430 = vrot.slane %v367, %v1429
        %v1431 = vlaneseq
        %v1432 = vshrl.u32 %v1431, 7
        %v1433 = vsub.s32 7, %v1432
        %v1434 = vrot.slane %v368, %v1433
        %v1435 = vlaneseq
        %v1436 = vshrl.u32 %v1435, 7
        %v1437 = vsub.s32 7, %v1436
        %v1438 = vrot.slane %v369, %v1437
        %v1439 = vmul.f32 %v1390, %v1410
        %v1440 = vmul.f32 %v1391, %v1414
        %v1441 = vmul.f32 %v1392, %v1418
        %v1442 = vmul.f32 %v1393, %v1422
        %v1443 = vmul.f32 %v1394, %v1426
        %v1444 = vmul.f32 %v1395, %v1430
        %v1445 = vmul.f32 %v1396, %v1434
        %v1446 = vmul.f32 %v1406, %v1438
        %1447 = vrot.lane.b32.xlu0 %v704, 95
        %v1448 = vpop.permute.xlu0 %1447
        %1449 = vrot.lane.b32.xlu0 %v706, 95
        %v1450 = vpop.permute.xlu0 %1449
        %1451 = vrot.lane.b32.xlu0 %v775, 95
        %v1452 = vpop.permute.xlu0 %1451
        %1453 = vrot.lane.b32.xlu0 %v777, 95
        %v1454 = vpop.permute.xlu0 %1453
        %1455 = vrot.lane.b32.xlu0 %v846, 95
        %v1456 = vpop.permute.xlu0 %1455
        %1457 = vrot.lane.b32.xlu0 %v848, 95
        %v1458 = vpop.permute.xlu0 %1457
        %1459 = vrot.lane.b32.xlu0 %v917, 95
        %v1460 = vpop.permute.xlu0 %1459
        %1461 = vrot.lane.b32.xlu0 %v919, 95
        %v1462 = vpop.permute.xlu0 %1461
        %vm1463 = vcmask 777216
        %v1464 = vsel %vm1463, %v1448, %v1450
        %v1465 = vsel %vm1463, %v1450, %v1452
        %v1466 = vsel %vm1463, %v1452, %v1454
        %v1467 = vsel %vm1463, %v1454, %v1456
        %v1468 = vsel %vm1463, %v1456, %v1458
        %v1469 = vsel %vm1463, %v1458, %v1460
        %v1470 = vsel %vm1463, %v1460, %v1462
        %v1480 = vsel %vm1463, %v1462, %v1448
        %v1481 = vlaneseq
        %v1482 = vshrl.u32 %v1481, 7
        %v1483 = vsub.s32 0, %v1482
        %v1484 = vrot.slane %v370, %v1483
        %v1485 = vlaneseq
        %v1486 = vshrl.u32 %v1485, 7
        %v1487 = vsub.s32 0, %v1486
        %v1488 = vrot.slane %v371, %v1487
        %v1489 = vlaneseq
        %v1490 = vshrl.u32 %v1489, 7
        %v1491 = vsub.s32 0, %v1490
        %v1492 = vrot.slane %v372, %v1491
        %v1493 = vlaneseq
        %v1494 = vshrl.u32 %v1493, 7
        %v1495 = vsub.s32 0, %v1494
        %v1496 = vrot.slane %v373, %v1495
        %v1497 = vlaneseq
        %v1498 = vshrl.u32 %v1497, 7
        %v1499 = vsub.s32 0, %v1498
        %v1500 = vrot.slane %v374, %v1499
        %v1501 = vlaneseq
        %v1502 = vshrl.u32 %v1501, 7
        %v1503 = vsub.s32 0, %v1502
        %v1504 = vrot.slane %v375, %v1503
        %v1505 = vlaneseq
        %v1506 = vshrl.u32 %v1505, 7
        %v1507 = vsub.s32 0, %v1506
        %v1508 = vrot.slane %v376, %v1507
        %v1509 = vlaneseq
        %v1510 = vshrl.u32 %v1509, 7
        %v1511 = vsub.s32 0, %v1510
        %v1512 = vrot.slane %v377, %v1511
        %v1513 = vmul.f32 %v1464, %v1484
        %v1514 = vmul.f32 %v1465, %v1488
        %v1515 = vmul.f32 %v1466, %v1492
        %v1516 = vmul.f32 %v1467, %v1496
        %v1517 = vmul.f32 %v1468, %v1500
        %v1518 = vmul.f32 %v1469, %v1504
        %v1519 = vmul.f32 %v1470, %v1508
        %v1520 = vmul.f32 %v1480, %v1512
        %v1529 = vrot.slane %v1069, 4
        %v1530 = vrot.slane %v1070, 4
        %v1531 = vrot.slane %v1071, 4
        %v1532 = vrot.slane %v1072, 4
        %v1533 = vrot.slane %v1073, 4
        %v1534 = vrot.slane %v1074, 4
        %v1535 = vrot.slane %v1075, 4
        %v1536 = vrot.slane %v1076, 4
        %v1553 = vrot.slane %v1217, 4
        %v1554 = vrot.slane %v1218, 4
        %v1555 = vrot.slane %v1219, 4
        %v1556 = vrot.slane %v1220, 4
        %v1557 = vrot.slane %v1221, 4
        %v1558 = vrot.slane %v1222, 4
        %v1559 = vrot.slane %v1223, 4
        %v1560 = vrot.slane %v1224, 4
        %v1577 = vrot.slane %v1291, 4
        %v1578 = vrot.slane %v1292, 4
        %v1579 = vrot.slane %v1293, 4
        %v1580 = vrot.slane %v1294, 4
        %v1581 = vrot.slane %v1295, 4
        %v1582 = vrot.slane %v1296, 4
        %v1583 = vrot.slane %v1297, 4
        %v1584 = vrot.slane %v1298, 4
        %v1601 = vrot.slane %v1439, 4
        %v1602 = vrot.slane %v1440, 4
        %v1603 = vrot.slane %v1441, 4
        %v1604 = vrot.slane %v1442, 4
        %v1605 = vrot.slane %v1443, 4
        %v1606 = vrot.slane %v1444, 4
        %v1607 = vrot.slane %v1445, 4
        %v1608 = vrot.slane %v1446, 4
        %vm1617 = vcmask 1043456
        %v1618 = vsel %vm1617, %v995, %v1529
        %v1619 = vsel %vm1617, %v996, %v1530
        %v1620 = vsel %vm1617, %v997, %v1531
        %v1621 = vsel %vm1617, %v998, %v1532
        %v1622 = vsel %vm1617, %v999, %v1533
        %v1623 = vsel %vm1617, %v1000, %v1534
        %v1624 = vsel %vm1617, %v1001, %v1535
        %v1625 = vsel %vm1617, %v1002, %v1536
        %v1626 = vsel %vm1617, %v1143, %v1553
        %v1627 = vsel %vm1617, %v1144, %v1554
        %v1628 = vsel %vm1617, %v1145, %v1555
        %v1629 = vsel %vm1617, %v1146, %v1556
        %v1630 = vsel %vm1617, %v1147, %v1557
        %v1631 = vsel %vm1617, %v1148, %v1558
        %v1632 = vsel %vm1617, %v1149, %v1559
        %v1633 = vsel %vm1617, %v1150, %v1560
        %v1634 = vsel %vm1617, %v704, %v1577
        %v1635 = vsel %vm1617, %v706, %v1578
        %v1636 = vsel %vm1617, %v775, %v1579
        %v1637 = vsel %vm1617, %v777, %v1580
        %v1638 = vsel %vm1617, %v846, %v1581
        %v1639 = vsel %vm1617, %v848, %v1582
        %v1640 = vsel %vm1617, %v917, %v1583
        %v1641 = vsel %vm1617, %v919, %v1584
        %v1642 = vsel %vm1617, %v1365, %v1601
        %v1643 = vsel %vm1617, %v1366, %v1602
        %v1644 = vsel %vm1617, %v1367, %v1603
        %v1645 = vsel %vm1617, %v1368, %v1604
        %v1646 = vsel %vm1617, %v1369, %v1605
        %v1647 = vsel %vm1617, %v1370, %v1606
        %v1648 = vsel %vm1617, %v1371, %v1607
        %v1649 = vsel %vm1617, %v1372, %v1608
        %v1650 = vld [vmem:[%s3] sm:$0xff]
        %vm1651 = vcmask 293888
        %v1653 = vsel %vm1651, %v1650, 0
        %v1656 = vsel %vm1617, %v1513, 0
        %v1659 = vsel %vm1617, %v1514, 0
        %v1662 = vsel %vm1617, %v1515, 0
        %v1665 = vsel %vm1617, %v1516, 0
        %v1668 = vsel %vm1617, %v1517, 0
        %v1671 = vsel %vm1617, %v1518, 0
        %v1674 = vsel %vm1617, %v1519, 0
        %v1677 = vsel %vm1617, %v1520, 0
        %1679 = vmatprep.subr.mxu0 %v1619
        %1680 = vmatpush1.msra.mxu0 %v1618
        %1681 = vmatprep.subr.mxu0 %v1627
        %1682 = vmatpush1.msra.mxu0 %v1626
        %1683 = vmatprep.subr.mxu0 %v1635
        %1684 = vmatpush1.msra.mxu0 %v1634
        %1685 = vmatprep.subr.mxu0 %v1643
        %1686 = vmatpush1.msra.mxu0 %v1642
        %1687 = vmatprep.subr.mxu0 %v1659
        %1688 = vmatpush1.msra.mxu0 %v1656
        %1689 = vmatprep.subr.mxu0 0.0
        %1690 = vmatpush1.msra.mxu0 0.0
        %1691 = vmatprep.subr.mxu0 0.0
        %1692 = vmatpush1.msra.mxu0 0.0
        %1693 = vmatprep.subr.mxu0 0.0
        %1694 = vmatpush1.msra.mxu0 0.0
        %1695 = vmatprep.subr.mxu0 0.0
        %1696 = vmatpush1.msra.mxu0 0.0
        %1697 = vmatprep.subr.mxu0 0.0
        %1698 = vmatpush1.msra.mxu0 0.0
        %1699 = vmatprep.subr.mxu0 0.0
        %1700 = vmatpush1.msra.mxu0 0.0
        %1701 = vmatprep.subr.mxu0 0.0
        %1702 = vmatpush1.msra.mxu0 0.0
        %1703 = vmatprep.subr.mxu0 0.0
        %1704 = vmatpush1.msra.mxu0 0.0
        %1705 = vmatprep.subr.mxu0 0.0
        %1706 = vmatpush1.msra.mxu0 0.0
        %1707 = vmatprep.subr.mxu0 0.0
        %1708 = vmatpush1.msra.mxu0 0.0
        %1709 = vmatprep.subr.mxu0 0.0
        %1710 = vmatpush1.msra.mxu0 0.0
        %1711 = vmatprep.subr.mxu0 0.0
        %1712 = vmatpush1.msra.mxu0 0.0
        %1713 = vmatprep.subr.mxu0 0.0
        %1714 = vmatpush1.msra.mxu0 0.0
        %1715 = vmatprep.subr.mxu0 0.0
        %1716 = vmatpush1.msra.mxu0 0.0
        %1717 = vmatprep.subr.mxu0 0.0
        %1718 = vmatpush1.msra.mxu0 0.0
        %1719 = vmatprep.subr.mxu0 0.0
        %1720 = vmatpush1.msra.mxu0 0.0
        %1721 = vmatprep.subr.mxu0 0.0
        %1722 = vmatpush1.msra.mxu0 0.0
        %1723 = vmatprep.subr.mxu0 0.0
        %1724 = vmatpush1.msra.mxu0 0.0
        %1725 = vmatprep.subr.mxu0 0.0
        %1726 = vmatpush1.msra.mxu0 0.0
        %1727 = vmatprep.subr.mxu0 0.0
        %1728 = vmatpush1.msra.mxu0 0.0
        %1729 = vmatprep.subr.mxu0 0.0
        %1730 = vmatpush1.msra.mxu0 0.0
        %1731 = vmatprep.subr.mxu0 0.0
        %1732 = vmatpush1.msra.mxu0 0.0
        %1733 = vmatprep.subr.mxu0 0.0
        %1734 = vmatpush1.msra.mxu0 0.0
        %1735 = vmatprep.subr.mxu0 0.0
        %1736 = vmatpush1.msra.mxu0 0.0
        %1737 = vmatprep.subr.mxu0 0.0
        %1738 = vmatpush1.msra.mxu0 0.0
        %1739 = vmatprep.subr.mxu0 0.0
        %1740 = vmatpush1.msra.mxu0 0.0
        %1741 = vmatprep.subr.mxu0 0.0
        %1742 = vmatpush1.msra.mxu0 0.0
        %1743 = vmatprep.mubr.f32.mxu0 0.0
        %1744 = vmatmul.mubr.f32.gmra.mrb[0].mxu0 %v1653
        %v1745 = vpop.f32.mrb[0].mxu0
        %v1746 = vadd.f32 0.0, %v1745
        %v1747 = vpop.f32.mrb[0].mxu0
        %v1748 = vadd.f32 0.0, %v1747
        %1749 = vdwg.mxu0
        %1750 = vmatprep.subr.mxu0 %v1621
        %1751 = vmatpush1.msra.mxu0 %v1620
        %1752 = vmatprep.subr.mxu0 %v1629
        %1753 = vmatpush1.msra.mxu0 %v1628
        %1754 = vmatprep.subr.mxu0 %v1637
        %1755 = vmatpush1.msra.mxu0 %v1636
        %1756 = vmatprep.subr.mxu0 %v1645
        %1757 = vmatpush1.msra.mxu0 %v1644
        %1758 = vmatprep.subr.mxu0 %v1665
        %1759 = vmatpush1.msra.mxu0 %v1662
        %1760 = vmatprep.subr.mxu0 0.0
        %1761 = vmatpush1.msra.mxu0 0.0
        %1762 = vmatprep.subr.mxu0 0.0
        %1763 = vmatpush1.msra.mxu0 0.0
        %1764 = vmatprep.subr.mxu0 0.0
        %1765 = vmatpush1.msra.mxu0 0.0
        %1766 = vmatprep.subr.mxu0 0.0
        %1767 = vmatpush1.msra.mxu0 0.0
        %1768 = vmatprep.subr.mxu0 0.0
        %1769 = vmatpush1.msra.mxu0 0.0
        %1770 = vmatprep.subr.mxu0 0.0
        %1771 = vmatpush1.msra.mxu0 0.0
        %1772 = vmatprep.subr.mxu0 0.0
        %1773 = vmatpush1.msra.mxu0 0.0
        %1774 = vmatprep.subr.mxu0 0.0
        %1775 = vmatpush1.msra.mxu0 0.0
        %1776 = vmatprep.subr.mxu0 0.0
        %1777 = vmatpush1.msra.mxu0 0.0
        %1778 = vmatprep.subr.mxu0 0.0
        %1779 = vmatpush1.msra.mxu0 0.0
        %1780 = vmatprep.subr.mxu0 0.0
        %1781 = vmatpush1.msra.mxu0 0.0
        %1782 = vmatprep.subr.mxu0 0.0
        %1783 = vmatpush1.msra.mxu0 0.0
        %1784 = vmatprep.subr.mxu0 0.0
        %1785 = vmatpush1.msra.mxu0 0.0
        %1786 = vmatprep.subr.mxu0 0.0
        %1787 = vmatpush1.msra.mxu0 0.0
        %1788 = vmatprep.subr.mxu0 0.0
        %1789 = vmatpush1.msra.mxu0 0.0
        %1790 = vmatprep.subr.mxu0 0.0
        %1791 = vmatpush1.msra.mxu0 0.0
        %1792 = vmatprep.subr.mxu0 0.0
        %1793 = vmatpush1.msra.mxu0 0.0
        %1794 = vmatprep.subr.mxu0 0.0
        %1795 = vmatpush1.msra.mxu0 0.0
        %1796 = vmatprep.subr.mxu0 0.0
        %1797 = vmatpush1.msra.mxu0 0.0
        %1798 = vmatprep.subr.mxu0 0.0
        %1799 = vmatpush1.msra.mxu0 0.0
        %1800 = vmatprep.subr.mxu0 0.0
        %1801 = vmatpush1.msra.mxu0 0.0
        %1802 = vmatprep.subr.mxu0 0.0
        %1803 = vmatpush1.msra.mxu0 0.0
        %1804 = vmatprep.subr.mxu0 0.0
        %1805 = vmatpush1.msra.mxu0 0.0
        %1806 = vmatprep.subr.mxu0 0.0
        %1807 = vmatpush1.msra.mxu0 0.0
        %1808 = vmatprep.subr.mxu0 0.0
        %1809 = vmatpush1.msra.mxu0 0.0
        %1810 = vmatprep.subr.mxu0 0.0
        %1811 = vmatpush1.msra.mxu0 0.0
        %1812 = vmatprep.subr.mxu0 0.0
        %1813 = vmatpush1.msra.mxu0 0.0
        %1814 = vmatprep.mubr.f32.mxu0 0.0
        %1815 = vmatmul.mubr.f32.gmra.mrb[0].mxu0 %v1653
        %v1816 = vpop.f32.mrb[0].mxu0
        %v1817 = vadd.f32 0.0, %v1816
        %v1818 = vpop.f32.mrb[0].mxu0
        %v1819 = vadd.f32 0.0, %v1818
        %1820 = vdwg.mxu0
        %1821 = vmatprep.subr.mxu0 %v1623
        %1822 = vmatpush1.msra.mxu0 %v1622
        %1823 = vmatprep.subr.mxu0 %v1631
        %1824 = vmatpush1.msra.mxu0 %v1630
        %1825 = vmatprep.subr.mxu0 %v1639
        %1826 = vmatpush1.msra.mxu0 %v1638
        %1827 = vmatprep.subr.mxu0 %v1647
        %1828 = vmatpush1.msra.mxu0 %v1646
        %1829 = vmatprep.subr.mxu0 %v1671
        %1830 = vmatpush1.msra.mxu0 %v1668
        %1831 = vmatprep.subr.mxu0 0.0
        %1832 = vmatpush1.msra.mxu0 0.0
        %1833 = vmatprep.subr.mxu0 0.0
        %1834 = vmatpush1.msra.mxu0 0.0
        %1835 = vmatprep.subr.mxu0 0.0
        %1836 = vmatpush1.msra.mxu0 0.0
        %1837 = vmatprep.subr.mxu0 0.0
        %1838 = vmatpush1.msra.mxu0 0.0
        %1839 = vmatprep.subr.mxu0 0.0
        %1840 = vmatpush1.msra.mxu0 0.0
        %1841 = vmatprep.subr.mxu0 0.0
        %1842 = vmatpush1.msra.mxu0 0.0
        %1843 = vmatprep.subr.mxu0 0.0
        %1844 = vmatpush1.msra.mxu0 0.0
        %1845 = vmatprep.subr.mxu0 0.0
        %1846 = vmatpush1.msra.mxu0 0.0
        %1847 = vmatprep.subr.mxu0 0.0
        %1848 = vmatpush1.msra.mxu0 0.0
        %1849 = vmatprep.subr.mxu0 0.0
        %1850 = vmatpush1.msra.mxu0 0.0
        %1851 = vmatprep.subr.mxu0 0.0
        %1852 = vmatpush1.msra.mxu0 0.0
        %1853 = vmatprep.subr.mxu0 0.0
        %1854 = vmatpush1.msra.mxu0 0.0
        %1855 = vmatprep.subr.mxu0 0.0
        %1856 = vmatpush1.msra.mxu0 0.0
        %1857 = vmatprep.subr.mxu0 0.0
        %1858 = vmatpush1.msra.mxu0 0.0
        %1859 = vmatprep.subr.mxu0 0.0
        %1860 = vmatpush1.msra.mxu0 0.0
        %1861 = vmatprep.subr.mxu0 0.0
        %1862 = vmatpush1.msra.mxu0 0.0
        %1863 = vmatprep.subr.mxu0 0.0
        %1864 = vmatpush1.msra.mxu0 0.0
        %1865 = vmatprep.subr.mxu0 0.0
        %1866 = vmatpush1.msra.mxu0 0.0
        %1867 = vmatprep.subr.mxu0 0.0
        %1868 = vmatpush1.msra.mxu0 0.0
        %1869 = vmatprep.subr.mxu0 0.0
        %1870 = vmatpush1.msra.mxu0 0.0
        %1871 = vmatprep.subr.mxu0 0.0
        %1872 = vmatpush1.msra.mxu0 0.0
        %1873 = vmatprep.subr.mxu0 0.0
        %1874 = vmatpush1.msra.mxu0 0.0
        %1875 = vmatprep.subr.mxu0 0.0
        %1876 = vmatpush1.msra.mxu0 0.0
        %1877 = vmatprep.subr.mxu0 0.0
        %1878 = vmatpush1.msra.mxu0 0.0
        %1879 = vmatprep.subr.mxu0 0.0
        %1880 = vmatpush1.msra.mxu0 0.0
        %1881 = vmatprep.subr.mxu0 0.0
        %1882 = vmatpush1.msra.mxu0 0.0
        %1883 = vmatprep.subr.mxu0 0.0
        %1884 = vmatpush1.msra.mxu0 0.0
        %1885 = vmatprep.mubr.f32.mxu0 0.0
        %1886 = vmatmul.mubr.f32.gmra.mrb[0].mxu0 %v1653
        %v1887 = vpop.f32.mrb[0].mxu0
        %v1888 = vadd.f32 0.0, %v1887
        %v1889 = vpop.f32.mrb[0].mxu0
        %v1890 = vadd.f32 0.0, %v1889
        %1891 = vdwg.mxu0
        %1892 = vmatprep.subr.mxu0 %v1625
        %1893 = vmatpush1.msra.mxu0 %v1624
        %1894 = vmatprep.subr.mxu0 %v1633
        %1895 = vmatpush1.msra.mxu0 %v1632
        %1896 = vmatprep.subr.mxu0 %v1641
        %1897 = vmatpush1.msra.mxu0 %v1640
        %1898 = vmatprep.subr.mxu0 %v1649
        %1899 = vmatpush1.msra.mxu0 %v1648
        %1900 = vmatprep.subr.mxu0 %v1677
        %1901 = vmatpush1.msra.mxu0 %v1674
        %1902 = vmatprep.subr.mxu0 0.0
        %1903 = vmatpush1.msra.mxu0 0.0
        %1904 = vmatprep.subr.mxu0 0.0
        %1905 = vmatpush1.msra.mxu0 0.0
        %1906 = vmatprep.subr.mxu0 0.0
        %1907 = vmatpush1.msra.mxu0 0.0
        %1908 = vmatprep.subr.mxu0 0.0
        %1909 = vmatpush1.msra.mxu0 0.0
        %1910 = vmatprep.subr.mxu0 0.0
        %1911 = vmatpush1.msra.mxu0 0.0
        %1912 = vmatprep.subr.mxu0 0.0
        %1913 = vmatpush1.msra.mxu0 0.0
        %1914 = vmatprep.subr.mxu0 0.0
        %1915 = vmatpush1.msra.mxu0 0.0
        %1916 = vmatprep.subr.mxu0 0.0
        %1917 = vmatpush1.msra.mxu0 0.0
        %1918 = vmatprep.subr.mxu0 0.0
        %1919 = vmatpush1.msra.mxu0 0.0
        %1920 = vmatprep.subr.mxu0 0.0
        %1921 = vmatpush1.msra.mxu0 0.0
        %1922 = vmatprep.subr.mxu0 0.0
        %1923 = vmatpush1.msra.mxu0 0.0
        %1924 = vmatprep.subr.mxu0 0.0
        %1925 = vmatpush1.msra.mxu0 0.0
        %1926 = vmatprep.subr.mxu0 0.0
        %1927 = vmatpush1.msra.mxu0 0.0
        %1928 = vmatprep.subr.mxu0 0.0
        %1929 = vmatpush1.msra.mxu0 0.0
        %1930 = vmatprep.subr.mxu0 0.0
        %1931 = vmatpush1.msra.mxu0 0.0
        %1932 = vmatprep.subr.mxu0 0.0
        %1933 = vmatpush1.msra.mxu0 0.0
        %1934 = vmatprep.subr.mxu0 0.0
        %1935 = vmatpush1.msra.mxu0 0.0
        %1936 = vmatprep.subr.mxu0 0.0
        %1937 = vmatpush1.msra.mxu0 0.0
        %1938 = vmatprep.subr.mxu0 0.0
        %1939 = vmatpush1.msra.mxu0 0.0
        %1940 = vmatprep.subr.mxu0 0.0
        %1941 = vmatpush1.msra.mxu0 0.0
        %1942 = vmatprep.subr.mxu0 0.0
        %1943 = vmatpush1.msra.mxu0 0.0
        %1944 = vmatprep.subr.mxu0 0.0
        %1945 = vmatpush1.msra.mxu0 0.0
        %1946 = vmatprep.subr.mxu0 0.0
        %1947 = vmatpush1.msra.mxu0 0.0
        %1948 = vmatprep.subr.mxu0 0.0
        %1949 = vmatpush1.msra.mxu0 0.0
        %1950 = vmatprep.subr.mxu0 0.0
        %1951 = vmatpush1.msra.mxu0 0.0
        %1952 = vmatprep.subr.mxu0 0.0
        %1953 = vmatpush1.msra.mxu0 0.0
        %1954 = vmatprep.subr.mxu0 0.0
        %1955 = vmatpush1.msra.mxu0 0.0
        %1956 = vmatprep.mubr.f32.mxu0 0.0
        %1957 = vmatmul.mubr.f32.gmra.mrb[0].mxu0 %v1653
        %v1958 = vpop.f32.mrb[0].mxu0
        %v1959 = vadd.f32 0.0, %v1958
        %v1960 = vpop.f32.mrb[0].mxu0
        %v1961 = vadd.f32 0.0, %v1960
        %1962 = vdwg.mxu0
        %v1963 = vld [vmem:[%s4] sm:$0xff]
        %1965 = vset.pattern.permute.xlu0 0
        %1966 = vperm.xlu0 %1965, %v1963
        %v1967 = vpop.permute.xlu0 %1966
        %v1969 = vmul.f32 %v1746, %v1967
        %v1970 = vmul.f32 %v1748, %v1967
        %v1971 = vmul.f32 %v1817, %v1967
        %v1972 = vmul.f32 %v1819, %v1967
        %v1973 = vmul.f32 %v1888, %v1967
        %v1974 = vmul.f32 %v1890, %v1967
        %v1975 = vmul.f32 %v1959, %v1967
        %v1976 = vmul.f32 %v1961, %v1967
        %v1977 = vld [vmem:[%s5] sm:$0xff]
        %1979 = vset.pattern.permute.xlu0 0
        %1980 = vperm.xlu0 %1979, %v1977
        %v1981 = vpop.permute.xlu0 %1980
        %v1983 = vadd.f32 %v1969, %v1981
        %v1984 = vadd.f32 %v1970, %v1981
        %v1985 = vadd.f32 %v1971, %v1981
        %v1986 = vadd.f32 %v1972, %v1981
        %v1987 = vadd.f32 %v1973, %v1981
        %v1988 = vadd.f32 %v1974, %v1981
        %v1989 = vadd.f32 %v1975, %v1981
        %v1990 = vadd.f32 %v1976, %v1981
        %v1991 = vmax.f32 %v1983, 0.0
        %v1992 = vmax.f32 %v1984, 0.0
        %v1993 = vmax.f32 %v1985, 0.0
        %v1994 = vmax.f32 %v1986, 0.0
        %v1995 = vmax.f32 %v1987, 0.0
        %v1996 = vmax.f32 %v1988, 0.0
        %v1997 = vmax.f32 %v1989, 0.0
        %v1998 = vmax.f32 %v1990, 0.0
        %2000 = vrot.lane.b32.xlu0 %v1998, 33
        %v2001 = vpop.permute.xlu0 %2000
        %2010 = vrot.lane.b32.xlu0 %v1991, 33
        %v2011 = vpop.permute.xlu0 %2010
        %2012 = vrot.lane.b32.xlu0 %v1992, 33
        %v2013 = vpop.permute.xlu0 %2012
        %2014 = vrot.lane.b32.xlu0 %v1993, 33
        %v2015 = vpop.permute.xlu0 %2014
        %2016 = vrot.lane.b32.xlu0 %v1994, 33
        %v2017 = vpop.permute.xlu0 %2016
        %2018 = vrot.lane.b32.xlu0 %v1995, 33
        %v2019 = vpop.permute.xlu0 %2018
        %2020 = vrot.lane.b32.xlu0 %v1996, 33
        %v2021 = vpop.permute.xlu0 %2020
        %2022 = vrot.lane.b32.xlu0 %v1997, 33
        %v2023 = vpop.permute.xlu0 %2022
        %v2024 = vsel %vm946, %v2011, %v2013
        %v2025 = vsel %vm946, %v2013, %v2015
        %v2026 = vsel %vm946, %v2015, %v2017
        %v2027 = vsel %vm946, %v2017, %v2019
        %v2028 = vsel %vm946, %v2019, %v2021
        %v2029 = vsel %vm946, %v2021, %v2023
        %v2030 = vsel %vm946, %v2023, %v2001
        %v2039 = vsel %vm946, %v2001, %v2011
        %v2040 = vmul.f32 %v2039, %v966
        %v2041 = vmul.f32 %v2024, %v970
        %v2042 = vmul.f32 %v2025, %v974
        %v2043 = vmul.f32 %v2026, %v978
        %v2044 = vmul.f32 %v2027, %v982
        %v2045 = vmul.f32 %v2028, %v986
        %v2046 = vmul.f32 %v2029, %v990
        %v2047 = vmul.f32 %v2030, %v994
        %2048 = vrot.lane.b32.xlu0 %v1998, 32
        %v2049 = vpop.permute.xlu0 %2048
        %2051 = vrot.lane.b32.xlu0 %v1991, 32
        %v2052 = vpop.permute.xlu0 %2051
        %2053 = vrot.lane.b32.xlu0 %v1992, 32
        %v2054 = vpop.permute.xlu0 %2053
        %2055 = vrot.lane.b32.xlu0 %v1993, 32
        %v2056 = vpop.permute.xlu0 %2055
        %2057 = vrot.lane.b32.xlu0 %v1994, 32
        %v2058 = vpop.permute.xlu0 %2057
        %2059 = vrot.lane.b32.xlu0 %v1995, 32
        %v2060 = vpop.permute.xlu0 %2059
        %2061 = vrot.lane.b32.xlu0 %v1996, 32
        %v2062 = vpop.permute.xlu0 %2061
        %2063 = vrot.lane.b32.xlu0 %v1997, 32
        %v2064 = vpop.permute.xlu0 %2063
        %v2065 = vsel %vm1020, %v2052, %v2054
        %v2066 = vsel %vm1020, %v2054, %v2056
        %v2067 = vsel %vm1020, %v2056, %v2058
        %v2068 = vsel %vm1020, %v2058, %v2060
        %v2069 = vsel %vm1020, %v2060, %v2062
        %v2070 = vsel %vm1020, %v2062, %v2064
        %v2071 = vsel %vm1020, %v2064, %v2049
        %v2080 = vsel %vm1020, %v2049, %v2052
        %v2081 = vmul.f32 %v2080, %v1040
        %v2082 = vmul.f32 %v2065, %v1044
        %v2083 = vmul.f32 %v2066, %v1048
        %v2084 = vmul.f32 %v2067, %v1052
        %v2085 = vmul.f32 %v2068, %v1056
        %v2086 = vmul.f32 %v2069, %v1060
        %v2087 = vmul.f32 %v2070, %v1064
        %v2088 = vmul.f32 %v2071, %v1068
        %2089 = vrot.lane.b32.xlu0 %v1998, 31
        %v2090 = vpop.permute.xlu0 %2089
        %2092 = vrot.lane.b32.xlu0 %v1991, 31
        %v2093 = vpop.permute.xlu0 %2092
        %2094 = vrot.lane.b32.xlu0 %v1992, 31
        %v2095 = vpop.permute.xlu0 %2094
        %2096 = vrot.lane.b32.xlu0 %v1993, 31
        %v2097 = vpop.permute.xlu0 %2096
        %2098 = vrot.lane.b32.xlu0 %v1994, 31
        %v2099 = vpop.permute.xlu0 %2098
        %2100 = vrot.lane.b32.xlu0 %v1995, 31
        %v2101 = vpop.permute.xlu0 %2100
        %2102 = vrot.lane.b32.xlu0 %v1996, 31
        %v2103 = vpop.permute.xlu0 %2102
        %2104 = vrot.lane.b32.xlu0 %v1997, 31
        %v2105 = vpop.permute.xlu0 %2104
        %v2106 = vsel %vm1094, %v2093, %v2095
        %v2107 = vsel %vm1094, %v2095, %v2097
        %v2108 = vsel %vm1094, %v2097, %v2099
        %v2109 = vsel %vm1094, %v2099, %v2101
        %v2110 = vsel %vm1094, %v2101, %v2103
        %v2111 = vsel %vm1094, %v2103, %v2105
        %v2112 = vsel %vm1094, %v2105, %v2090
        %v2121 = vsel %vm1094, %v2090, %v2093
        %v2122 = vmul.f32 %v2121, %v1114
        %v2123 = vmul.f32 %v2106, %v1118
        %v2124 = vmul.f32 %v2107, %v1122
        %v2125 = vmul.f32 %v2108, %v1126
        %v2126 = vmul.f32 %v2109, %v1130
        %v2127 = vmul.f32 %v2110, %v1134
        %v2128 = vmul.f32 %v2111, %v1138
        %v2129 = vmul.f32 %v2112, %v1142
        %2130 = vrot.lane.b32.xlu0 %v1998, 1
        %v2131 = vpop.permute.xlu0 %2130
        %2133 = vrot.lane.b32.xlu0 %v1991, 1
        %v2134 = vpop.permute.xlu0 %2133
        %2135 = vrot.lane.b32.xlu0 %v1992, 1
        %v2136 = vpop.permute.xlu0 %2135
        %2137 = vrot.lane.b32.xlu0 %v1993, 1
        %v2138 = vpop.permute.xlu0 %2137
        %2139 = vrot.lane.b32.xlu0 %v1994, 1
        %v2140 = vpop.permute.xlu0 %2139
        %2141 = vrot.lane.b32.xlu0 %v1995, 1
        %v2142 = vpop.permute.xlu0 %2141
        %2143 = vrot.lane.b32.xlu0 %v1996, 1
        %v2144 = vpop.permute.xlu0 %2143
        %2145 = vrot.lane.b32.xlu0 %v1997, 1
        %v2146 = vpop.permute.xlu0 %2145
        %v2147 = vsel %vm1168, %v2134, %v2136
        %v2148 = vsel %vm1168, %v2136, %v2138
        %v2149 = vsel %vm1168, %v2138, %v2140
        %v2150 = vsel %vm1168, %v2140, %v2142
        %v2151 = vsel %vm1168, %v2142, %v2144
        %v2152 = vsel %vm1168, %v2144, %v2146
        %v2153 = vsel %vm1168, %v2146, %v2131
        %v2162 = vsel %vm1168, %v2131, %v2134
        %v2163 = vmul.f32 %v2162, %v1188
        %v2164 = vmul.f32 %v2147, %v1192
        %v2165 = vmul.f32 %v2148, %v1196
        %v2166 = vmul.f32 %v2149, %v1200
        %v2167 = vmul.f32 %v2150, %v1204
        %v2168 = vmul.f32 %v2151, %v1208
        %v2169 = vmul.f32 %v2152, %v1212
        %v2170 = vmul.f32 %v2153, %v1216
        %2171 = vrot.lane.b32.xlu0 %v1991, 127
        %v2172 = vpop.permute.xlu0 %2171
        %2173 = vrot.lane.b32.xlu0 %v1992, 127
        %v2174 = vpop.permute.xlu0 %2173
        %2175 = vrot.lane.b32.xlu0 %v1993, 127
        %v2176 = vpop.permute.xlu0 %2175
        %2177 = vrot.lane.b32.xlu0 %v1994, 127
        %v2178 = vpop.permute.xlu0 %2177
        %2179 = vrot.lane.b32.xlu0 %v1995, 127
        %v2180 = vpop.permute.xlu0 %2179
        %2181 = vrot.lane.b32.xlu0 %v1996, 127
        %v2182 = vpop.permute.xlu0 %2181
        %2183 = vrot.lane.b32.xlu0 %v1997, 127
        %v2184 = vpop.permute.xlu0 %2183
        %2185 = vrot.lane.b32.xlu0 %v1998, 127
        %v2186 = vpop.permute.xlu0 %2185
        %v2187 = vsel %vm1241, %v2172, %v2174
        %v2188 = vsel %vm1241, %v2174, %v2176
        %v2189 = vsel %vm1241, %v2176, %v2178
        %v2190 = vsel %vm1241, %v2178, %v2180
        %v2191 = vsel %vm1241, %v2180, %v2182
        %v2192 = vsel %vm1241, %v2182, %v2184
        %v2193 = vsel %vm1241, %v2184, %v2186
        %v2203 = vsel %vm1241, %v2186, %v2172
        %v2204 = vmul.f32 %v2187, %v1262
        %v2205 = vmul.f32 %v2188, %v1266
        %v2206 = vmul.f32 %v2189, %v1270
        %v2207 = vmul.f32 %v2190, %v1274
        %v2208 = vmul.f32 %v2191, %v1278
        %v2209 = vmul.f32 %v2192, %v1282
        %v2210 = vmul.f32 %v2193, %v1286
        %v2211 = vmul.f32 %v2203, %v1290
        %2212 = vrot.lane.b32.xlu0 %v1991, 97
        %v2213 = vpop.permute.xlu0 %2212
        %2214 = vrot.lane.b32.xlu0 %v1992, 97
        %v2215 = vpop.permute.xlu0 %2214
        %2216 = vrot.lane.b32.xlu0 %v1993, 97
        %v2217 = vpop.permute.xlu0 %2216
        %2218 = vrot.lane.b32.xlu0 %v1994, 97
        %v2219 = vpop.permute.xlu0 %2218
        %2220 = vrot.lane.b32.xlu0 %v1995, 97
        %v2221 = vpop.permute.xlu0 %2220
        %2222 = vrot.lane.b32.xlu0 %v1996, 97
        %v2223 = vpop.permute.xlu0 %2222
        %2224 = vrot.lane.b32.xlu0 %v1997, 97
        %v2225 = vpop.permute.xlu0 %2224
        %2226 = vrot.lane.b32.xlu0 %v1998, 97
        %v2227 = vpop.permute.xlu0 %2226
        %v2228 = vsel %vm1315, %v2213, %v2215
        %v2229 = vsel %vm1315, %v2215, %v2217
        %v2230 = vsel %vm1315, %v2217, %v2219
        %v2231 = vsel %vm1315, %v2219, %v2221
        %v2232 = vsel %vm1315, %v2221, %v2223
        %v2233 = vsel %vm1315, %v2223, %v2225
        %v2234 = vsel %vm1315, %v2225, %v2227
        %v2244 = vsel %vm1315, %v2227, %v2213
        %v2245 = vmul.f32 %v2228, %v1336
        %v2246 = vmul.f32 %v2229, %v1340
        %v2247 = vmul.f32 %v2230, %v1344
        %v2248 = vmul.f32 %v2231, %v1348
        %v2249 = vmul.f32 %v2232, %v1352
        %v2250 = vmul.f32 %v2233, %v1356
        %v2251 = vmul.f32 %v2234, %v1360
        %v2252 = vmul.f32 %v2244, %v1364
        %2253 = vrot.lane.b32.xlu0 %v1991, 96
        %v2254 = vpop.permute.xlu0 %2253
        %2255 = vrot.lane.b32.xlu0 %v1992, 96
        %v2256 = vpop.permute.xlu0 %2255
        %2257 = vrot.lane.b32.xlu0 %v1993, 96
        %v2258 = vpop.permute.xlu0 %2257
        %2259 = vrot.lane.b32.xlu0 %v1994, 96
        %v2260 = vpop.permute.xlu0 %2259
        %2261 = vrot.lane.b32.xlu0 %v1995, 96
        %v2262 = vpop.permute.xlu0 %2261
        %2263 = vrot.lane.b32.xlu0 %v1996, 96
        %v2264 = vpop.permute.xlu0 %2263
        %2265 = vrot.lane.b32.xlu0 %v1997, 96
        %v2266 = vpop.permute.xlu0 %2265
        %2267 = vrot.lane.b32.xlu0 %v1998, 96
        %v2268 = vpop.permute.xlu0 %2267
        %v2269 = vsel %vm1389, %v2254, %v2256
        %v2270 = vsel %vm1389, %v2256, %v2258
        %v2271 = vsel %vm1389, %v2258, %v2260
        %v2272 = vsel %vm1389, %v2260, %v2262
        %v2273 = vsel %vm1389, %v2262, %v2264
        %v2274 = vsel %vm1389, %v2264, %v2266
        %v2275 = vsel %vm1389, %v2266, %v2268
        %v2285 = vsel %vm1389, %v2268, %v2254
        %v2286 = vmul.f32 %v2269, %v1410
        %v2287 = vmul.f32 %v2270, %v1414
        %v2288 = vmul.f32 %v2271, %v1418
        %v2289 = vmul.f32 %v2272, %v1422
        %v2290 = vmul.f32 %v2273, %v1426
        %v2291 = vmul.f32 %v2274, %v1430
        %v2292 = vmul.f32 %v2275, %v1434
        %v2293 = vmul.f32 %v2285, %v1438
        %2294 = vrot.lane.b32.xlu0 %v1991, 95
        %v2295 = vpop.permute.xlu0 %2294
        %2296 = vrot.lane.b32.xlu0 %v1992, 95
        %v2297 = vpop.permute.xlu0 %2296
        %2298 = vrot.lane.b32.xlu0 %v1993, 95
        %v2299 = vpop.permute.xlu0 %2298
        %2300 = vrot.lane.b32.xlu0 %v1994, 95
        %v2301 = vpop.permute.xlu0 %2300
        %2302 = vrot.lane.b32.xlu0 %v1995, 95
        %v2303 = vpop.permute.xlu0 %2302
        %2304 = vrot.lane.b32.xlu0 %v1996, 95
        %v2305 = vpop.permute.xlu0 %2304
        %2306 = vrot.lane.b32.xlu0 %v1997, 95
        %v2307 = vpop.permute.xlu0 %2306
        %2308 = vrot.lane.b32.xlu0 %v1998, 95
        %v2309 = vpop.permute.xlu0 %2308
        %v2310 = vsel %vm1463, %v2295, %v2297
        %v2311 = vsel %vm1463, %v2297, %v2299
        %v2312 = vsel %vm1463, %v2299, %v2301
        %v2313 = vsel %vm1463, %v2301, %v2303
        %v2314 = vsel %vm1463, %v2303, %v2305
        %v2315 = vsel %vm1463, %v2305, %v2307
        %v2316 = vsel %vm1463, %v2307, %v2309
        %v2326 = vsel %vm1463, %v2309, %v2295
        %v2327 = vmul.f32 %v2310, %v1484
        %v2328 = vmul.f32 %v2311, %v1488
        %v2329 = vmul.f32 %v2312, %v1492
        %v2330 = vmul.f32 %v2313, %v1496
        %v2331 = vmul.f32 %v2314, %v1500
        %v2332 = vmul.f32 %v2315, %v1504
        %v2333 = vmul.f32 %v2316, %v1508
        %v2334 = vmul.f32 %v2326, %v1512
        %v2335 = vld [vmem:[%s6] sm:$0xff]
        %vm2336 = vcmask 588800
        %v2338 = vsel %vm2336, %v2335, 0
        %2340 = vmatprep.subr.mxu0 %v2041
        %2341 = vmatpush1.msra.mxu0 %v2040
        %2342 = vmatprep.subr.mxu0 %v2082
        %2343 = vmatpush1.msra.mxu0 %v2081
        %2344 = vmatprep.subr.mxu0 %v2123
        %2345 = vmatpush1.msra.mxu0 %v2122
        %2346 = vmatprep.subr.mxu0 %v2164
        %2347 = vmatpush1.msra.mxu0 %v2163
        %2348 = vmatprep.subr.mxu0 %v1992
        %2349 = vmatpush1.msra.mxu0 %v1991
        %2350 = vmatprep.subr.mxu0 %v2205
        %2351 = vmatpush1.msra.mxu0 %v2204
        %2352 = vmatprep.subr.mxu0 %v2246
        %2353 = vmatpush1.msra.mxu0 %v2245
        %2354 = vmatprep.subr.mxu0 %v2287
        %2355 = vmatpush1.msra.mxu0 %v2286
        %2356 = vmatprep.subr.mxu0 %v2328
        %2357 = vmatpush1.msra.mxu0 %v2327
        %2358 = vmatprep.subr.mxu0 0.0
        %2359 = vmatpush1.msra.mxu0 0.0
        %2360 = vmatprep.subr.mxu0 0.0
        %2361 = vmatpush1.msra.mxu0 0.0
        %2362 = vmatprep.subr.mxu0 0.0
        %2363 = vmatpush1.msra.mxu0 0.0
        %2364 = vmatprep.subr.mxu0 0.0
        %2365 = vmatpush1.msra.mxu0 0.0
        %2366 = vmatprep.subr.mxu0 0.0
        %2367 = vmatpush1.msra.mxu0 0.0
        %2368 = vmatprep.subr.mxu0 0.0
        %2369 = vmatpush1.msra.mxu0 0.0
        %2370 = vmatprep.subr.mxu0 0.0
        %2371 = vmatpush1.msra.mxu0 0.0
        %2372 = vmatprep.subr.mxu0 0.0
        %2373 = vmatpush1.msra.mxu0 0.0
        %2374 = vmatprep.subr.mxu0 0.0
        %2375 = vmatpush1.msra.mxu0 0.0
        %2376 = vmatprep.subr.mxu0 0.0
        %2377 = vmatpush1.msra.mxu0 0.0
        %2378 = vmatprep.subr.mxu0 0.0
        %2379 = vmatpush1.msra.mxu0 0.0
        %2380 = vmatprep.subr.mxu0 0.0
        %2381 = vmatpush1.msra.mxu0 0.0
        %2382 = vmatprep.subr.mxu0 0.0
        %2383 = vmatpush1.msra.mxu0 0.0
        %2384 = vmatprep.subr.mxu0 0.0
        %2385 = vmatpush1.msra.mxu0 0.0
        %2386 = vmatprep.subr.mxu0 0.0
        %2387 = vmatpush1.msra.mxu0 0.0
        %2388 = vmatprep.subr.mxu0 0.0
        %2389 = vmatpush1.msra.mxu0 0.0
        %2390 = vmatprep.subr.mxu0 0.0
        %2391 = vmatpush1.msra.mxu0 0.0
        %2392 = vmatprep.subr.mxu0 0.0
        %2393 = vmatpush1.msra.mxu0 0.0
        %2394 = vmatprep.subr.mxu0 0.0
        %2395 = vmatpush1.msra.mxu0 0.0
        %2396 = vmatprep.subr.mxu0 0.0
        %2397 = vmatpush1.msra.mxu0 0.0
        %2398 = vmatprep.subr.mxu0 0.0
        %2399 = vmatpush1.msra.mxu0 0.0
        %2400 = vmatprep.subr.mxu0 0.0
        %2401 = vmatpush1.msra.mxu0 0.0
        %2402 = vmatprep.subr.mxu0 0.0
        %2403 = vmatpush1.msra.mxu0 0.0
        %2404 = vmatprep.mubr.f32.mxu0 0.0
        %2405 = vmatmul.mubr.f32.gmra.mrb[0].mxu0 %v2338
        %v2406 = vpop.f32.mrb[0].mxu0
        %v2407 = vadd.f32 0.0, %v2406
        %v2408 = vpop.f32.mrb[0].mxu0
        %v2409 = vadd.f32 0.0, %v2408
        %2410 = vdwg.mxu0
        %2411 = vmatprep.subr.mxu0 %v2043
        %2412 = vmatpush1.msra.mxu0 %v2042
        %2413 = vmatprep.subr.mxu0 %v2084
        %2414 = vmatpush1.msra.mxu0 %v2083
        %2415 = vmatprep.subr.mxu0 %v2125
        %2416 = vmatpush1.msra.mxu0 %v2124
        %2417 = vmatprep.subr.mxu0 %v2166
        %2418 = vmatpush1.msra.mxu0 %v2165
        %2419 = vmatprep.subr.mxu0 %v1994
        %2420 = vmatpush1.msra.mxu0 %v1993
        %2421 = vmatprep.subr.mxu0 %v2207
        %2422 = vmatpush1.msra.mxu0 %v2206
        %2423 = vmatprep.subr.mxu0 %v2248
        %2424 = vmatpush1.msra.mxu0 %v2247
        %2425 = vmatprep.subr.mxu0 %v2289
        %2426 = vmatpush1.msra.mxu0 %v2288
        %2427 = vmatprep.subr.mxu0 %v2330
        %2428 = vmatpush1.msra.mxu0 %v2329
        %2429 = vmatprep.subr.mxu0 0.0
        %2430 = vmatpush1.msra.mxu0 0.0
        %2431 = vmatprep.subr.mxu0 0.0
        %2432 = vmatpush1.msra.mxu0 0.0
        %2433 = vmatprep.subr.mxu0 0.0
        %2434 = vmatpush1.msra.mxu0 0.0
        %2435 = vmatprep.subr.mxu0 0.0
        %2436 = vmatpush1.msra.mxu0 0.0
        %2437 = vmatprep.subr.mxu0 0.0
        %2438 = vmatpush1.msra.mxu0 0.0
        %2439 = vmatprep.subr.mxu0 0.0
        %2440 = vmatpush1.msra.mxu0 0.0
        %2441 = vmatprep.subr.mxu0 0.0
        %2442 = vmatpush1.msra.mxu0 0.0
        %2443 = vmatprep.subr.mxu0 0.0
        %2444 = vmatpush1.msra.mxu0 0.0
        %2445 = vmatprep.subr.mxu0 0.0
        %2446 = vmatpush1.msra.mxu0 0.0
        %2447 = vmatprep.subr.mxu0 0.0
        %2448 = vmatpush1.msra.mxu0 0.0
        %2449 = vmatprep.subr.mxu0 0.0
        %2450 = vmatpush1.msra.mxu0 0.0
        %2451 = vmatprep.subr.mxu0 0.0
        %2452 = vmatpush1.msra.mxu0 0.0
        %2453 = vmatprep.subr.mxu0 0.0
        %2454 = vmatpush1.msra.mxu0 0.0
        %2455 = vmatprep.subr.mxu0 0.0
        %2456 = vmatpush1.msra.mxu0 0.0
        %2457 = vmatprep.subr.mxu0 0.0
        %2458 = vmatpush1.msra.mxu0 0.0
        %2459 = vmatprep.subr.mxu0 0.0
        %2460 = vmatpush1.msra.mxu0 0.0
        %2461 = vmatprep.subr.mxu0 0.0
        %2462 = vmatpush1.msra.mxu0 0.0
        %2463 = vmatprep.subr.mxu0 0.0
        %2464 = vmatpush1.msra.mxu0 0.0
        %2465 = vmatprep.subr.mxu0 0.0
        %2466 = vmatpush1.msra.mxu0 0.0
        %2467 = vmatprep.subr.mxu0 0.0
        %2468 = vmatpush1.msra.mxu0 0.0
        %2469 = vmatprep.subr.mxu0 0.0
        %2470 = vmatpush1.msra.mxu0 0.0
        %2471 = vmatprep.subr.mxu0 0.0
        %2472 = vmatpush1.msra.mxu0 0.0
        %2473 = vmatprep.subr.mxu0 0.0
        %2474 = vmatpush1.msra.mxu0 0.0
        %2475 = vmatprep.mubr.f32.mxu0 0.0
        %2476 = vmatmul.mubr.f32.gmra.mrb[0].mxu0 %v2338
        %v2477 = vpop.f32.mrb[0].mxu0
        %v2478 = vadd.f32 0.0, %v2477
        %v2479 = vpop.f32.mrb[0].mxu0
        %v2480 = vadd.f32 0.0, %v2479
        %2481 = vdwg.mxu0
        %2482 = vmatprep.subr.mxu0 %v2045
        %2483 = vmatpush1.msra.mxu0 %v2044
        %2484 = vmatprep.subr.mxu0 %v2086
        %2485 = vmatpush1.msra.mxu0 %v2085
        %2486 = vmatprep.subr.mxu0 %v2127
        %2487 = vmatpush1.msra.mxu0 %v2126
        %2488 = vmatprep.subr.mxu0 %v2168
        %2489 = vmatpush1.msra.mxu0 %v2167
        %2490 = vmatprep.subr.mxu0 %v1996
        %2491 = vmatpush1.msra.mxu0 %v1995
        %2492 = vmatprep.subr.mxu0 %v2209
        %2493 = vmatpush1.msra.mxu0 %v2208
        %2494 = vmatprep.subr.mxu0 %v2250
        %2495 = vmatpush1.msra.mxu0 %v2249
        %2496 = vmatprep.subr.mxu0 %v2291
        %2497 = vmatpush1.msra.mxu0 %v2290
        %2498 = vmatprep.subr.mxu0 %v2332
        %2499 = vmatpush1.msra.mxu0 %v2331
        %2500 = vmatprep.subr.mxu0 0.0
        %2501 = vmatpush1.msra.mxu0 0.0
        %2502 = vmatprep.subr.mxu0 0.0
        %2503 = vmatpush1.msra.mxu0 0.0
        %2504 = vmatprep.subr.mxu0 0.0
        %2505 = vmatpush1.msra.mxu0 0.0
        %2506 = vmatprep.subr.mxu0 0.0
        %2507 = vmatpush1.msra.mxu0 0.0
        %2508 = vmatprep.subr.mxu0 0.0
        %2509 = vmatpush1.msra.mxu0 0.0
        %2510 = vmatprep.subr.mxu0 0.0
        %2511 = vmatpush1.msra.mxu0 0.0
        %2512 = vmatprep.subr.mxu0 0.0
        %2513 = vmatpush1.msra.mxu0 0.0
        %2514 = vmatprep.subr.mxu0 0.0
        %2515 = vmatpush1.msra.mxu0 0.0
        %2516 = vmatprep.subr.mxu0 0.0
        %2517 = vmatpush1.msra.mxu0 0.0
        %2518 = vmatprep.subr.mxu0 0.0
        %2519 = vmatpush1.msra.mxu0 0.0
        %2520 = vmatprep.subr.mxu0 0.0
        %2521 = vmatpush1.msra.mxu0 0.0
        %2522 = vmatprep.subr.mxu0 0.0
        %2523 = vmatpush1.msra.mxu0 0.0
        %2524 = vmatprep.subr.mxu0 0.0
        %2525 = vmatpush1.msra.mxu0 0.0
        %2526 = vmatprep.subr.mxu0 0.0
        %2527 = vmatpush1.msra.mxu0 0.0
        %2528 = vmatprep.subr.mxu0 0.0
        %2529 = vmatpush1.msra.mxu0 0.0
        %2530 = vmatprep.subr.mxu0 0.0
        %2531 = vmatpush1.msra.mxu0 0.0
        %2532 = vmatprep.subr.mxu0 0.0
        %2533 = vmatpush1.msra.mxu0 0.0
        %2534 = vmatprep.subr.mxu0 0.0
        %2535 = vmatpush1.msra.mxu0 0.0
        %2536 = vmatprep.subr.mxu0 0.0
        %2537 = vmatpush1.msra.mxu0 0.0
        %2538 = vmatprep.subr.mxu0 0.0
        %2539 = vmatpush1.msra.mxu0 0.0
        %2540 = vmatprep.subr.mxu0 0.0
        %2541 = vmatpush1.msra.mxu0 0.0
        %2542 = vmatprep.subr.mxu0 0.0
        %2543 = vmatpush1.msra.mxu0 0.0
        %2544 = vmatprep.subr.mxu0 0.0
        %2545 = vmatpush1.msra.mxu0 0.0
        %2546 = vmatprep.mubr.f32.mxu0 0.0
        %2547 = vmatmul.mubr.f32.gmra.mrb[0].mxu0 %v2338
        %v2548 = vpop.f32.mrb[0].mxu0
        %v2549 = vadd.f32 0.0, %v2548
        %v2550 = vpop.f32.mrb[0].mxu0
        %v2551 = vadd.f32 0.0, %v2550
        %2552 = vdwg.mxu0
        %2553 = vmatprep.subr.mxu0 %v2047
        %2554 = vmatpush1.msra.mxu0 %v2046
        %2555 = vmatprep.subr.mxu0 %v2088
        %2556 = vmatpush1.msra.mxu0 %v2087
        %2557 = vmatprep.subr.mxu0 %v2129
        %2558 = vmatpush1.msra.mxu0 %v2128
        %2559 = vmatprep.subr.mxu0 %v2170
        %2560 = vmatpush1.msra.mxu0 %v2169
        %2561 = vmatprep.subr.mxu0 %v1998
        %2562 = vmatpush1.msra.mxu0 %v1997
        %2563 = vmatprep.subr.mxu0 %v2211
        %2564 = vmatpush1.msra.mxu0 %v2210
        %2565 = vmatprep.subr.mxu0 %v2252
        %2566 = vmatpush1.msra.mxu0 %v2251
        %2567 = vmatprep.subr.mxu0 %v2293
        %2568 = vmatpush1.msra.mxu0 %v2292
        %2569 = vmatprep.subr.mxu0 %v2334
        %2570 = vmatpush1.msra.mxu0 %v2333
        %2571 = vmatprep.subr.mxu0 0.0
        %2572 = vmatpush1.msra.mxu0 0.0
        %2573 = vmatprep.subr.mxu0 0.0
        %2574 = vmatpush1.msra.mxu0 0.0
        %2575 = vmatprep.subr.mxu0 0.0
        %2576 = vmatpush1.msra.mxu0 0.0
        %2577 = vmatprep.subr.mxu0 0.0
        %2578 = vmatpush1.msra.mxu0 0.0
        %2579 = vmatprep.subr.mxu0 0.0
        %2580 = vmatpush1.msra.mxu0 0.0
        %2581 = vmatprep.subr.mxu0 0.0
        %2582 = vmatpush1.msra.mxu0 0.0
        %2583 = vmatprep.subr.mxu0 0.0
        %2584 = vmatpush1.msra.mxu0 0.0
        %2585 = vmatprep.subr.mxu0 0.0
        %2586 = vmatpush1.msra.mxu0 0.0
        %2587 = vmatprep.subr.mxu0 0.0
        %2588 = vmatpush1.msra.mxu0 0.0
        %2589 = vmatprep.subr.mxu0 0.0
        %2590 = vmatpush1.msra.mxu0 0.0
        %2591 = vmatprep.subr.mxu0 0.0
        %2592 = vmatpush1.msra.mxu0 0.0
        %2593 = vmatprep.subr.mxu0 0.0
        %2594 = vmatpush1.msra.mxu0 0.0
        %2595 = vmatprep.subr.mxu0 0.0
        %2596 = vmatpush1.msra.mxu0 0.0
        %2597 = vmatprep.subr.mxu0 0.0
        %2598 = vmatpush1.msra.mxu0 0.0
        %2599 = vmatprep.subr.mxu0 0.0
        %2600 = vmatpush1.msra.mxu0 0.0
        %2601 = vmatprep.subr.mxu0 0.0
        %2602 = vmatpush1.msra.mxu0 0.0
        %2603 = vmatprep.subr.mxu0 0.0
        %2604 = vmatpush1.msra.mxu0 0.0
        %2605 = vmatprep.subr.mxu0 0.0
        %2606 = vmatpush1.msra.mxu0 0.0
        %2607 = vmatprep.subr.mxu0 0.0
        %2608 = vmatpush1.msra.mxu0 0.0
        %2609 = vmatprep.subr.mxu0 0.0
        %2610 = vmatpush1.msra.mxu0 0.0
        %2611 = vmatprep.subr.mxu0 0.0
        %2612 = vmatpush1.msra.mxu0 0.0
        %2613 = vmatprep.subr.mxu0 0.0
        %2614 = vmatpush1.msra.mxu0 0.0
        %2615 = vmatprep.subr.mxu0 0.0
        %2616 = vmatpush1.msra.mxu0 0.0
        %2617 = vmatprep.mubr.f32.mxu0 0.0
        %2618 = vmatmul.mubr.f32.gmra.mrb[0].mxu0 %v2338
        %v2619 = vpop.f32.mrb[0].mxu0
        %v2620 = vadd.f32 0.0, %v2619
        %v2621 = vpop.f32.mrb[0].mxu0
        %v2622 = vadd.f32 0.0, %v2621
        %2623 = vdwg.mxu0
        %v2624 = vld [vmem:[%s7] sm:$0xff]
        %2626 = vset.pattern.permute.xlu0 0
        %2627 = vperm.xlu0 %2626, %v2624
        %v2628 = vpop.permute.xlu0 %2627
        %v2630 = vmul.f32 %v2407, %v2628
        %v2631 = vmul.f32 %v2409, %v2628
        %v2632 = vmul.f32 %v2478, %v2628
        %v2633 = vmul.f32 %v2480, %v2628
        %v2634 = vmul.f32 %v2549, %v2628
        %v2635 = vmul.f32 %v2551, %v2628
        %v2636 = vmul.f32 %v2620, %v2628
        %v2637 = vmul.f32 %v2622, %v2628
        %v2638 = vld [vmem:[%s8] sm:$0xff]
        %2640 = vset.pattern.permute.xlu0 0
        %2641 = vperm.xlu0 %2640, %v2638
        %v2642 = vpop.permute.xlu0 %2641
        %v2644 = vadd.f32 %v2630, %v2642
        %v2645 = vadd.f32 %v2631, %v2642
        %v2646 = vadd.f32 %v2632, %v2642
        %v2647 = vadd.f32 %v2633, %v2642
        %v2648 = vadd.f32 %v2634, %v2642
        %v2649 = vadd.f32 %v2635, %v2642
        %v2650 = vadd.f32 %v2636, %v2642
        %v2651 = vadd.f32 %v2637, %v2642
        %v2652 = vmax.f32 %v2644, 0.0
        %v2653 = vmax.f32 %v2645, 0.0
        %v2654 = vmax.f32 %v2646, 0.0
        %v2655 = vmax.f32 %v2647, 0.0
        %v2656 = vmax.f32 %v2648, 0.0
        %v2657 = vmax.f32 %v2649, 0.0
        %v2658 = vmax.f32 %v2650, 0.0
        %v2659 = vmax.f32 %v2651, 0.0
        %2660 = vst [vmem:[%s355] sm:$0xff] %v2652
        %2661 = vst [vmem:[%s355 + $0x8] sm:$0xff] %v2653
        %2662 = vst [vmem:[%s355 + $0x10] sm:$0xff] %v2654
        %2663 = vst [vmem:[%s355 + $0x18] sm:$0xff] %v2655
        %2664 = vst [vmem:[%s355 + $0x20] sm:$0xff] %v2656
        %2665 = vst [vmem:[%s355 + $0x28] sm:$0xff] %v2657
        %2666 = vst [vmem:[%s355 + $0x30] sm:$0xff] %v2658
        %2667 = vst [vmem:[%s355 + $0x38] sm:$0xff] %v2659
        %s2668 = sand.u32 %s227, 1
        %s2669 = scalar_lea.sflag [#allocation4], %s2668
        %s2670 = sand.u32 %s227, 1
        %s2671 = smul.addr %s2670, 64
        %s2672 = scalar_lea.vmem [#allocation7], %s2671
        // Predicated region
        $region65: #{tpu_custom_call.1} parent=55 // pred_check
          %p2673 = pneg %p237
        $region66: #{tpu_custom_call.1} parent=55 // pred_check_branch
          %2675 = sbr.rel (%p2673) target = $region68
        $region67: #{tpu_custom_call.1} parent=55 // pred_region
          %s2677 = ssub.s32 1024, 1024
          %2678 = vsyncadd %s2669, %s2677
          %s2679 = smul.addr %s25, 8
          %s2680 = smul.addr %s2679, 128
          %s2681 = scalar_lea.hbm %s9, %s2680
          %s2683 = sshll.u32 %s2672, 4
          %s2684 = int_to_ptr.vmem [resolvable:$true] %s2683
          %2686 = dma.vmem_to_hbm [thread:$0]  %s2684, 1024, %s2681, %s2669
        $region68: #{tpu_custom_call.1} parent=55 // pred_fallthru
          _
      $region56: #{tpu_custom_call.1} parent=5 // pred_fallthru
        _
      %p2687 = scmp.le.s32.totalorder 2, %s20
      // Predicated region
      $region69: #{tpu_custom_call.1} parent=5 // pred_check
        %p2688 = pneg %p2687
      $region70: #{tpu_custom_call.1} parent=5 // pred_check_branch
        %2690 = sbr.rel (%p2688) target = $region72
      $region71: #{tpu_custom_call.1} parent=5 // pred_region
        %s2691 = ssub.s32 %s20, 2
        // Predicated region
        $region73: #{tpu_custom_call.1} parent=71 // pred_check
          %p2692 = pneg %p243
        $region74: #{tpu_custom_call.1} parent=71 // pred_check_branch
          %2694 = sbr.rel (%p2692) target = $region76
        $region75: #{tpu_custom_call.1} parent=71 // pred_region
          %s2695 = sand.u32 %s228, 1
          %s2696 = scalar_lea.sflag [#allocation4], %s2695
          %s2697 = sand.u32 %s228, 1
          %s2698 = smul.addr %s2697, 64
          %s2699 = scalar_lea.vmem [#allocation7], %s2698
          %2700 = dma.done %s2696, 1024
        $region76: #{tpu_custom_call.1} parent=71 // pred_fallthru
          _
      $region72: #{tpu_custom_call.1} parent=5 // pred_fallthru
        _
    $region6: #{tpu_custom_call.1} parent=1 // loop_footer
      %s24 = sadd.s32 1, %s20
    $region7: #{tpu_custom_call.1} parent=1 // loop_footer_branch
      %19 = sbr.rel target = $region3
    $region8: #{tpu_custom_call.1} parent=1 // loop_exit
      _
    %2701 = vsyncpa [#allocation3], 1
    %s2702 = scalar_lea.sflag [#allocation3], 1
    %2703 = vsyncpa %s2702, 1
    %2704 = vsyncpa [#allocation6], 1
    %2705 = vsyncpa [#allocation4], 1
    %s2706 = scalar_lea.sflag [#allocation4], 1
    %2707 = vsyncpa %s2706, 1

</llo_original>
